<compile_context>
chip_gen: v7x
topology: tpu7x:2x2x1
jax: 0.10.0
libtpu: 0.0.40
codegen_flags: <defaults>
</compile_context>

<pallas_src>
import functools
import math

import jax
import jax.numpy as jnp
from jax.experimental import pallas as pl
from jax.experimental.pallas import tpu as pltpu


def _device_kind() -> str:
    try:
        return jax.devices()[0].device_kind.lower()
    except Exception:
        return ""


_KIND = _device_kind()
# bf16 softmax tail only where VPU/EUP are bf16-capable (v6e / v7x).
_SOFTMAX_BF16 = any(t in _KIND for t in ("v6", "v7", "7x"))
# Single-TensorCore chips: fold the whole batch into one grid step.
_SINGLE_TC = any(t in _KIND for t in ("v5 lite", "v5e", "v5lite", "v6 lite", "v6e", "v6lite"))


def _channel_attention_kernel(gamma_ref, x_ref, qkv_ref, o_ref, *,
                              n_feat, c, bb, softmax_bf16):
    # gamma_ref: (1,) f32 in SMEM
    # x_ref:  (1, C, N) f32  [per-batch path]  or  (bb*C, N) f32  [batched path]
    # qkv_ref: (N, 3N) bf16 (q|k|v packed once outside jit)
    gamma = gamma_ref[0]
    x = x_ref[...]
    if x.ndim == 3:                     # (1, C, N) -> (C, N)
        x = x[0]
    # x is now (bb*C, N).  One fused q/k/v projection on the MXU, f32 accumulation.
    fgh = jnp.dot(x.astype(jnp.bfloat16), qkv_ref[...],
                  preferred_element_type=jnp.float32)      # (bb*C, 3N)

    outs = []
    for b in range(bb):                                     # static, tiny (<= B)
        rows = slice(b * c, (b + 1) * c)
        f = fgh[rows, 0 * n_feat:1 * n_feat].astype(jnp.bfloat16)   # (C, N)
        g = fgh[rows, 1 * n_feat:2 * n_feat].astype(jnp.bfloat16)
        h = fgh[rows, 2 * n_feat:3 * n_feat].astype(jnp.bfloat16)

        # energy[m, n] = sum_c f[c, m] * g[c, n]  == bmm(f^T, g) -> (N, N)
        # bf16 operands -> single-pass MXU op; accumulation stays f32.
        energy = jax.lax.dot_general(
            f, g, dimension_numbers=(((0,), (0,)), ((), ())),
            preferred_element_type=jnp.float32)

        # softmax over dim=1 of the (B, N, N) tensor == axis 0 of this matrix.
        m = jnp.max(energy, axis=0, keepdims=True)
        if softmax_bf16:
            # bf16 exp / beta (v6e, v7x): halves EUP + vld/vst work on the 256x256
            # intermediate; denominator accumulated in f32.
            e = jnp.exp((energy - m).astype(jnp.bfloat16))
            denom = jnp.sum(e, axis=0, keepdims=True, dtype=jnp.float32)
            beta = e * pl.reciprocal(denom, approx=True).astype(jnp.bfloat16)
        else:
            # v5e: no bf16 VPU/EUP -> keep the softmax math in f32.
            e = jnp.exp(energy - m)
            denom = jnp.sum(e, axis=0, keepdims=True)
            beta = (e * pl.reciprocal(denom, approx=True)).astype(jnp.bfloat16)

        # o = bmm(h, beta): (C, N) @ (N, N) -> (C, N), f32 accumulation.
        o = jnp.dot(h, beta, preferred_element_type=jnp.float32)
        outs.append((gamma * o + x[rows]).astype(o_ref.dtype))

    out = outs[0] if bb == 1 else jnp.concatenate(outs, axis=0)
    if o_ref.ndim == 3:
        o_ref[0] = out
    else:
        o_ref[...] = out                 # unmasked (bb*C, N) store


def pack_qkv(q, k, v):
    """Pack q/k/v (N,N) into one bf16 (N, 3N) weight.  Call ONCE, outside jit."""
    return jnp.concatenate([q, k, v], axis=1).astype(jnp.bfloat16)


def channel_attention(x, qkv, gamma):
    """x: (B, C, H, W); qkv: (N, 3N) bf16 from pack_qkv; gamma: scalar."""
    B, C, H, W = x.shape
    N = H * W
    assert qkv.shape == (N, 3 * N)
    assert N % 128 == 0, "flattened spatial size must be a multiple of 128"

    bb = B if _SINGLE_TC else 1          # batch elements processed per grid step

    if bb == B:
        # Single grid step on single-TC chips: one (B*C, N) slab, full-tile blocks.
        x_in = x.reshape(B * C, N)
        grid = (1,)
        x_spec = pl.BlockSpec((B * C, N), lambda b: (0, 0))
        o_spec = pl.BlockSpec((B * C, N), lambda b: (0, 0))
        out_shape = jax.ShapeDtypeStruct((B * C, N), x.dtype)
    else:
        # One batch element per grid step; batch axis sharded across TensorCores.
        x_in = x.reshape(B, C, N)
        grid = (B,)
        x_spec = pl.BlockSpec((1, C, N), lambda b: (b, 0, 0))
        o_spec = pl.BlockSpec((1, C, N), lambda b: (b, 0, 0))
        out_shape = jax.ShapeDtypeStruct((B, C, N), x.dtype)

    gamma_arr = jnp.asarray(gamma, jnp.float32).reshape(1)
    kernel = functools.partial(_channel_attention_kernel,
                               n_feat=N, c=C, bb=bb, softmax_bf16=_SOFTMAX_BF16)

    out = pl.pallas_call(
        kernel,
        out_shape=out_shape,
        grid=grid,
        in_specs=[
            pl.BlockSpec(memory_space=pltpu.MemorySpace.SMEM),   # gamma scalar
            x_spec,                                              # x block
            pl.BlockSpec((N, 3 * N), lambda b: (0, 0)),          # qkv, VMEM-resident
        ],
        out_specs=o_spec,
        input_output_aliases={1: 0},     # x block == output block (residual add)
        compiler_params=pltpu.CompilerParams(
            dimension_semantics=("parallel",),
            vmem_limit_bytes=32 << 20),
    )(gamma_arr, x_in, qkv)
    return out.reshape(B, C, H, W)


def _reference(x, q, k, v, gamma):
    """Pure-JAX f32 reference of the (resolved) PyTorch forward."""
    B, C, H, W = x.shape
    N = H * W
    xf = x.reshape(B, C, N)
    f = jnp.einsum("bcn,nm->bcm", xf, q)
    g = jnp.einsum("bcn,nm->bcm", xf, k)
    h = jnp.einsum("bcn,nm->bcm", xf, v)
    energy = jnp.einsum("bcm,bcn->bmn", f, g)        # bmm(f^T, g)
    beta = jax.nn.softmax(energy, axis=1)            # dim=1
    o = jnp.einsum("bcm,bmn->bcn", h, beta)          # bmm(h, beta)
    return (gamma * o + xf).reshape(B, C, H, W)


if __name__ == "__main__":
    key = jax.random.PRNGKey(0)
    kx, kq, kk, kv = jax.random.split(key, 4)

    B, C, H, W = 2, 4, 16, 16
    N = H * W                                        # n_feature == n_channels == 256
    scale = 1.0 / math.sqrt(N)                       # keep activations O(1) for the demo

    x = jax.random.normal(kx, (B, C, H, W), dtype=jnp.float32)
    q = jax.random.uniform(kq, (N, N), jnp.float32) * scale
    k = jax.random.uniform(kk, (N, N), jnp.float32) * scale
    v = jax.random.uniform(kv, (N, N), jnp.float32) * scale
    # TODO(synk): self.gamma is undefined in the reference module; modeled as a
    # learnable scalar (SAGAN-style), initialized to 1.0 so the attention path runs.
    gamma = 1.0

    # Pack + cast the projection weights ONCE, outside jit (no per-call HBM traffic).
    qkv = pack_qkv(q, k, v)

    attn = jax.jit(channel_attention)
    y = jax.block_until_ready(attn(x, qkv, gamma))

    assert y.shape == (B, C, H, W)
    assert bool(jnp.all(jnp.isfinite(y)))

    y_ref = _reference(x, q, k, v, gamma)
    max_err = float(jnp.max(jnp.abs(y - y_ref)))
    assert bool(jnp.allclose(y, y_ref, atol=5e-2, rtol=5e-2)), max_err

    print("KERNEL_OK")
</pallas_src>

<mosaic_0001>
module attributes {stable_mosaic.version = 11 : i64} {
  func.func @_channel_attention_kernel(%arg0: i32, %arg1: memref<1xf32, #tpu.memory_space<smem>>, %arg2: memref<1x4x256xf32, #tpu.memory_space<vmem>>, %arg3: memref<256x768xbf16, #tpu.memory_space<vmem>>, %arg4: memref<1x4x256xf32, #tpu.memory_space<vmem>>) attributes {dimension_semantics = [#tpu.dimension_semantics<parallel>], iteration_bounds = array<i64: 2>, scalar_prefetch = 0 : i64, scratch_operands = 0 : i64, tpu.core_type = #tpu.core_type<tc>, window_params = [{transform_indices = @transform_0, window_bounds = array<i64: 1>}, {transform_indices = @transform_1, window_bounds = array<i64: 1, 4, 256>}, {pipeline_mode = #tpu.pipeline_mode<synchronous>, transform_indices = @transform_2, window_bounds = array<i64: 256, 768>}, {transform_indices = @transform_3, window_bounds = array<i64: 1, 4, 256>}]} {
    %c0 = arith.constant 0 : index
    %0 = memref.load %arg1[%c0] : memref<1xf32, #tpu.memory_space<smem>>
    %c0_0 = arith.constant 0 : index
    %c0_1 = arith.constant 0 : index
    %c0_2 = arith.constant 0 : index
    %1 = vector.load %arg2[%c0_0, %c0_1, %c0_2] : memref<1x4x256xf32, #tpu.memory_space<vmem>>, vector<1x4x256xf32>
    %2 = vector.shape_cast %1 : vector<1x4x256xf32> to vector<4x256xf32>
    %3 = arith.truncf %2 : vector<4x256xf32> to vector<4x256xbf16>
    %c0_3 = arith.constant 0 : index
    %c0_4 = arith.constant 0 : index
    %4 = vector.load %arg3[%c0_3, %c0_4] : memref<256x768xbf16, #tpu.memory_space<vmem>>, vector<256x768xbf16>
    %cst = arith.constant dense<0.000000e+00> : vector<4x768xf32>
    %5 = tpu.matmul %3, %4, %cst {dimension_numbers = #tpu.dot_dimension_numbers<[1], [0], [0], [1], [0, 0, 1, 1], [], []>} : vector<4x256xbf16>, vector<256x768xbf16>, vector<4x768xf32> -> vector<4x768xf32>
    %6 = vector.extract_strided_slice %5 {offsets = [0, 0], sizes = [4, 256], strides = [1, 1]} : vector<4x768xf32> to vector<4x256xf32>
    %7 = arith.truncf %6 : vector<4x256xf32> to vector<4x256xbf16>
    %8 = vector.extract_strided_slice %5 {offsets = [0, 256], sizes = [4, 256], strides = [1, 1]} : vector<4x768xf32> to vector<4x256xf32>
    %9 = arith.truncf %8 : vector<4x256xf32> to vector<4x256xbf16>
    %10 = vector.extract_strided_slice %5 {offsets = [0, 512], sizes = [4, 256], strides = [1, 1]} : vector<4x768xf32> to vector<4x256xf32>
    %11 = arith.truncf %10 : vector<4x256xf32> to vector<4x256xbf16>
    %cst_5 = arith.constant dense<0.000000e+00> : vector<256x256xf32>
    %12 = tpu.matmul %7, %9, %cst_5 {dimension_numbers = #tpu.dot_dimension_numbers<[0], [0], [1], [1], [0, 1, 1, 1], [], []>} : vector<4x256xbf16>, vector<4x256xbf16>, vector<256x256xf32> -> vector<256x256xf32>
    %cst_6 = arith.constant dense<0xFF800000> : vector<256xf32>
    %13 = vector.multi_reduction <maximumf>, %12, %cst_6 [0] : vector<256x256xf32> to vector<256xf32>
    %14 = vector.shape_cast %13 : vector<256xf32> to vector<1x256xf32>
    %15 = vector.broadcast %14 : vector<1x256xf32> to vector<256x256xf32>
    %16 = arith.subf %12, %15 : vector<256x256xf32>
    %17 = math.exp %16 : vector<256x256xf32>
    %cst_7 = arith.constant dense<0.000000e+00> : vector<256xf32>
    %18 = vector.multi_reduction <add>, %17, %cst_7 [0] : vector<256x256xf32> to vector<256xf32>
    %19 = vector.shape_cast %18 : vector<256xf32> to vector<1x256xf32>
    %20 = tpu.reciprocal %19 {approx = true} : vector<1x256xf32> -> vector<1x256xf32>
    %21 = vector.broadcast %20 : vector<1x256xf32> to vector<256x256xf32>
    %22 = arith.mulf %17, %21 : vector<256x256xf32>
    %23 = arith.truncf %22 : vector<256x256xf32> to vector<256x256xbf16>
    %cst_8 = arith.constant dense<0.000000e+00> : vector<4x256xf32>
    %24 = tpu.matmul %11, %23, %cst_8 {dimension_numbers = #tpu.dot_dimension_numbers<[1], [0], [0], [1], [0, 0, 1, 1], [], []>} : vector<4x256xbf16>, vector<256x256xbf16>, vector<4x256xf32> -> vector<4x256xf32>
    %25 = vector.broadcast %0 : f32 to vector<4x256xf32>
    %26 = arith.mulf %25, %24 : vector<4x256xf32>
    %27 = arith.addf %26, %2 : vector<4x256xf32>
    %c0_9 = arith.constant 0 : index
    %c0_10 = arith.constant 0 : index
    %c0_11 = arith.constant 0 : index
    %28 = vector.load %arg4[%c0_9, %c0_10, %c0_11] : memref<1x4x256xf32, #tpu.memory_space<vmem>>, vector<1x4x256xf32>
    %29 = vector.shape_cast %28 : vector<1x4x256xf32> to vector<4x256xf32>
    %30 = vector.shape_cast %27 : vector<4x256xf32> to vector<1x4x256xf32>
    tpu.vector_store %arg4[%c0_9, %c0_10, %c0_11], %30 {strides = array<i32>} : memref<1x4x256xf32, #tpu.memory_space<vmem>>, vector<1x4x256xf32>,
    return
  }
  func.func @transform_0(%arg0: i32) -> i32 {
    %c0_i32 = arith.constant 0 : i32
    %c0_i32_0 = arith.constant 0 : i32
    return %c0_i32 : i32
  }
  func.func @transform_1(%arg0: i32) -> (i32, i32, i32) {
    %c0_i32 = arith.constant 0 : i32
    %c0_i32_0 = arith.constant 0 : i32
    %c0_i32_1 = arith.constant 0 : i32
    return %arg0, %c0_i32, %c0_i32_0 : i32, i32, i32
  }
  func.func @transform_2(%arg0: i32) -> (i32, i32) {
    %c0_i32 = arith.constant 0 : i32
    %c0_i32_0 = arith.constant 0 : i32
    %c0_i32_1 = arith.constant 0 : i32
    return %c0_i32, %c0_i32_0 : i32, i32
  }
  func.func @transform_3(%arg0: i32) -> (i32, i32, i32) {
    %c0_i32 = arith.constant 0 : i32
    %c0_i32_0 = arith.constant 0 : i32
    %c0_i32_1 = arith.constant 0 : i32
    return %arg0, %c0_i32, %c0_i32_0 : i32, i32, i32
  }
}

</mosaic_0001>

<llo_original>
// kernel: channel_attention.1
$region0: #{channel_attention.1}
  #allocation0 [shape = 'u32[]', space=smem, size = 0x4, offset = 0x4, fixed_abs, tag = 'smem constant byte address 0x4 - core index']
  #allocation1 [shape = 'u32[144,128]{1,0:T(1,128)}', space=vmem, size = 0x12000, scoped, tag = 'internal scratch']
  #allocation2 [shape = 'f32[1]{0:T(128)S(6)}', space=smem, size = 0x200, scoped, tag = 'scoped memory for channel_attention.1']
  %s0 = inlined_call_operand.<no memory space> [shape: f32[1], index: 0, kind: input, shape index: {}]
  %s1 = inlined_call_operand.vmem [shape: f32[2,4,256], index: 1, kind: input, shape index: {}, may-alias: {1,3}]
  %s2 = inlined_call_operand.hbm [shape: bf16[256,768], index: 2, kind: input, shape index: {}]
  %s3 = inlined_call_operand.vmem [shape: f32[2,4,256], index: 3, kind: output, shape index: {}, may-alias: {1,3}]
  %s4 = sld [smem:[#allocation0]]
  $region49: #{channel_attention.1} parent=0
    _
  %s6 = ssub.s32 1, %s4
  %s7 = scalar_select 0, %s6, %s4
  %8 = sst [smem:[#allocation2]] %s0
  $region1: #{channel_attention.1} parent=0
    #allocation3 [shape = 'u8[393216]{0}', space=vmem, size = 0x60000, scoped, tag = 'input window, operand 2, single buffered']
    #allocation4 [shape = 's32[2]{0}', space=sflag, size = 0x8, scoped, tag = 'scoped memory for channel_attention.1']
    %9 = vsyncpa [#allocation4], 0
    loop: start=0, step=1, limit=4
    $region2: #{channel_attention.1} parent=1 // loop_pre_header
      _
    $region3: #{channel_attention.1} parent=1 // loop_header
      %s11 = sphi 0, %s15
      %p12 = scmp.ge.s32.totalorder %s11, 4
      %s19 = sphi 0, %s19
      %s21 = sphi 0, %s19
      %s22 = sphi 0, %s21
      %s36 = sphi 0, %s22
      %s42 = sphi 0, %s44
      %s45 = sphi 0, %s42
      %s46 = sphi 0, %s45
      %s62 = sphi 0, %s46
      %s66 = sphi 0, %s66
      %s68 = sphi 0, %s66
      %s69 = sphi 0, %s68
      %s83 = sphi 0, %s69
      %s89 = sphi 0, %s91
      %s92 = sphi 0, %s89
      %s93 = sphi 0, %s92
      %s109 = sphi 0, %s93
    $region4: #{channel_attention.1} parent=1 // loop_header_branch
      %14 = sbr.rel (%p12) target = $region8
    $region5: #{channel_attention.1} parent=1 // loop_body
      %s16 = ssub.s32 %s11, 1
      %s17 = ssub.s32 %s11, 2
      %s18 = sadd.s32 %s11, 1
      %s20 = sadd.s32 %s19, 1
      %p23 = scmp.eq.s32.totalorder %s11, 1
      %p24 = scmp.ne.s32.totalorder %s19, %s21
      %p25 = scmp.eq.s32.totalorder %s11, 0
      %p26 = por %p24, %p25
      %p27 = scmp.ne.s32.totalorder %s19, %s21
      %p28 = scmp.eq.s32.totalorder %s16, 1
      %p29 = por %p27, %p28
      %p30 = scmp.ne.s32.totalorder %s21, %s22
      %p31 = scmp.eq.s32.totalorder %s16, 0
      %p32 = por %p30, %p31
      %p33 = scmp.ne.s32.totalorder %s21, %s22
      %p34 = scmp.eq.s32.totalorder %s17, 1
      %p35 = por %p33, %p34
      %p37 = scmp.ne.s32.totalorder %s22, %s36
      %p38 = scmp.eq.s32.totalorder %s17, 0
      %p39 = por %p37, %p38
      %s40 = ssub.s32 %s11, %s18
      %p41 = scmp.eq.s32.totalorder %s40, 0
      %s43 = sadd.s32 %s42, 1
      %s44 = scalar_select %p41, %s42, %s43
      %p47 = pneg %p41
      %p48 = scmp.eq.s32.totalorder %s11, 1
      %p49 = por %p47, %p48
      %p50 = scmp.ne.s32.totalorder %s42, %s45
      %p51 = scmp.eq.s32.totalorder %s11, 0
      %p52 = por %p50, %p51
      %p53 = scmp.ne.s32.totalorder %s42, %s45
      %p54 = scmp.eq.s32.totalorder %s16, 1
      %p55 = por %p53, %p54
      %p56 = scmp.ne.s32.totalorder %s45, %s46
      %p57 = scmp.eq.s32.totalorder %s16, 0
      %p58 = por %p56, %p57
      %p59 = scmp.ne.s32.totalorder %s45, %s46
      %p60 = scmp.eq.s32.totalorder %s17, 1
      %p61 = por %p59, %p60
      %p63 = scmp.ne.s32.totalorder %s46, %s62
      %p64 = scmp.eq.s32.totalorder %s17, 0
      %p65 = por %p63, %p64
      %s67 = sadd.s32 %s66, 1
      %p70 = scmp.eq.s32.totalorder %s11, 1
      %p71 = scmp.ne.s32.totalorder %s66, %s68
      %p72 = scmp.eq.s32.totalorder %s11, 0
      %p73 = por %p71, %p72
      %p74 = scmp.ne.s32.totalorder %s66, %s68
      %p75 = scmp.eq.s32.totalorder %s16, 1
      %p76 = por %p74, %p75
      %p77 = scmp.ne.s32.totalorder %s68, %s69
      %p78 = scmp.eq.s32.totalorder %s16, 0
      %p79 = por %p77, %p78
      %p80 = scmp.ne.s32.totalorder %s68, %s69
      %p81 = scmp.eq.s32.totalorder %s17, 1
      %p82 = por %p80, %p81
      %p84 = scmp.ne.s32.totalorder %s69, %s83
      %p85 = scmp.eq.s32.totalorder %s17, 0
      %p86 = por %p84, %p85
      %s87 = ssub.s32 %s11, %s18
      %p88 = scmp.eq.s32.totalorder %s87, 0
      %s90 = sadd.s32 %s89, 1
      %s91 = scalar_select %p88, %s89, %s90
      %p94 = pneg %p88
      %p95 = scmp.eq.s32.totalorder %s11, 1
      %p96 = por %p94, %p95
      %p97 = scmp.ne.s32.totalorder %s89, %s92
      %p98 = scmp.eq.s32.totalorder %s11, 0
      %p99 = por %p97, %p98
      %p100 = scmp.ne.s32.totalorder %s89, %s92
      %p101 = scmp.eq.s32.totalorder %s16, 1
      %p102 = por %p100, %p101
      %p103 = scmp.ne.s32.totalorder %s92, %s93
      %p104 = scmp.eq.s32.totalorder %s16, 0
      %p105 = por %p103, %p104
      %p106 = scmp.ne.s32.totalorder %s92, %s93
      %p107 = scmp.eq.s32.totalorder %s17, 1
      %p108 = por %p106, %p107
      %p110 = scmp.ne.s32.totalorder %s93, %s109
      %p111 = scmp.eq.s32.totalorder %s17, 0
      %p112 = por %p110, %p111
      %p113 = scmp.le.s32.totalorder 1, %s11
      %p114 = scmp.lt.s32.totalorder %s11, 3
      %p115 = pnand %p113, %p114
      %p116 = pneg %p115
      // Predicated region
      $region9: #{channel_attention.1} parent=5 // pred_check
        _
      $region10: #{channel_attention.1} parent=5 // pred_check_branch
        %118 = sbr.rel (%p115) target = $region12
      $region11: #{channel_attention.1} parent=5 // pred_region
        %s119 = ssub.s32 %s11, 1
        // Predicated region
        $region13: #{channel_attention.1} parent=11 // pred_check
          %p120 = pneg %p32
        $region14: #{channel_attention.1} parent=11 // pred_check_branch
          %122 = sbr.rel (%p120) target = $region16
        $region15: #{channel_attention.1} parent=11 // pred_region
          _
        $region16: #{channel_attention.1} parent=11 // pred_fallthru
          _
        // Predicated region
        $region17: #{channel_attention.1} parent=11 // pred_check
          %p123 = pneg %p79
        $region18: #{channel_attention.1} parent=11 // pred_check_branch
          %125 = sbr.rel (%p123) target = $region20
        $region19: #{channel_attention.1} parent=11 // pred_region
          %s127 = ssub.s32 12288, 12288
          %128 = vsyncadd [#allocation4], %s127
          %s129 = sshll.u32 [#allocation3], 4
          %s130 = int_to_ptr.vmem [resolvable:$true] %s129
          %135 = dma.hbm_to_vmem [thread:$0]  %s2, 12288, %s130, [#allocation4], 384, 384, 24
        $region20: #{channel_attention.1} parent=11 // pred_fallthru
          _
      $region12: #{channel_attention.1} parent=5 // pred_fallthru
        _
      %p136 = scmp.lt.s32.totalorder %s11, 2
      // Predicated region
      $region21: #{channel_attention.1} parent=5 // pred_check
        %p137 = pneg %p136
      $region22: #{channel_attention.1} parent=5 // pred_check_branch
        %139 = sbr.rel (%p137) target = $region24
      $region23: #{channel_attention.1} parent=5 // pred_region
        // Predicated region
        $region25: #{channel_attention.1} parent=23 // pred_check
          %p140 = pneg %p52
        $region26: #{channel_attention.1} parent=23 // pred_check_branch
          %142 = sbr.rel (%p140) target = $region28
        $region27: #{channel_attention.1} parent=23 // pred_region
          %p143 = scmp.lt.s32.totalorder %s11, 1
          %s144 = scalar_select %p143, %s11, 1
          %s145 = smul.addr %s144, 2
          %s146 = smul.addr %s145, 4
          %s147 = scalar_lea.vmem %s1, %s146
        $region28: #{channel_attention.1} parent=23 // pred_fallthru
          _
      $region24: #{channel_attention.1} parent=5 // pred_fallthru
        _
      %p148 = scmp.le.s32.totalorder 1, %s11
      %p149 = scmp.lt.s32.totalorder %s11, 3
      %p150 = pnand %p148, %p149
      %p151 = pneg %p150
      // Predicated region
      $region29: #{channel_attention.1} parent=5 // pred_check
        _
      $region30: #{channel_attention.1} parent=5 // pred_check_branch
        %153 = sbr.rel (%p150) target = $region32
      $region31: #{channel_attention.1} parent=5 // pred_region
        %s154 = ssub.s32 %s11, 1
        // Predicated region
        $region33: #{channel_attention.1} parent=31 // pred_check
          %p155 = pneg %p79
        $region34: #{channel_attention.1} parent=31 // pred_check_branch
          %157 = sbr.rel (%p155) target = $region36
        $region35: #{channel_attention.1} parent=31 // pred_region
          %158 = dma.done [#allocation4], 12288
        $region36: #{channel_attention.1} parent=31 // pred_fallthru
          _
        %p159 = pneg %p32
        %p160 = pneg %p29
        %p161 = scmp.lt.s32.totalorder %s16, 1
        %s162 = scalar_select %p161, %s16, 1
        %s163 = smul.addr %s162, 2
        %s164 = smul.addr %s163, 4
        %s165 = scalar_lea.vmem %s1, %s164
        %p166 = pneg %p58
        %p167 = pneg %p55
        %p168 = pneg %p79
        %p169 = pneg %p76
        %p170 = pneg %p105
        %p171 = pneg %p102
        %p172 = scmp.lt.s32.totalorder %s16, 1
        %s173 = scalar_select %p172, %s16, 1
        %s174 = smul.addr %s173, 2
        %s175 = smul.addr %s174, 4
        %s176 = scalar_lea.vmem %s3, %s175
        %p177 = scmp.lt.s32.totalorder %s16, 1
        %s178 = scalar_select %p177, %s16, 1
        %s179 = smul.addr %s178, 2
        %s180 = smul.addr %s179, 4
        %s181 = scalar_lea.vmem %s1, %s180
        %p182 = scmp.lt.s32.totalorder %s16, 1
        %s183 = scalar_select %p182, %s16, 1
        %s184 = smul.addr %s183, 2
        %s185 = smul.addr %s184, 4
        %s186 = scalar_lea.vmem %s3, %s185
        %s188 = sld [smem:[#allocation2]]
        %v189 = vld [vmem:[%s181] sm:$0xff]
        %v191 = vcombine.high %v189, %v189
        %v193 = vpack.c.bf16 %v189, %v189
        %v194 = vpack.c.bf16 %v191, %v191
        %v195 = vld [vmem:[#allocation3] sm:$0xff]
        %v196 = vld [vmem:[#allocation3 + $0x8] sm:$0xff]
        %v197 = vld [vmem:[#allocation3 + $0x10] sm:$0xff]
        %v198 = vld [vmem:[#allocation3 + $0x18] sm:$0xff]
        %v199 = vld [vmem:[#allocation3 + $0x20] sm:$0xff]
        %v200 = vld [vmem:[#allocation3 + $0x28] sm:$0xff]
        %v201 = vld [vmem:[#allocation3 + $0x30] sm:$0xff]
        %v202 = vld [vmem:[#allocation3 + $0x38] sm:$0xff]
        %v203 = vld [vmem:[#allocation3 + $0x40] sm:$0xff]
        %v204 = vld [vmem:[#allocation3 + $0x48] sm:$0xff]
        %v205 = vld [vmem:[#allocation3 + $0x50] sm:$0xff]
        %v206 = vld [vmem:[#allocation3 + $0x58] sm:$0xff]
        %v207 = vld [vmem:[#allocation3 + $0x60] sm:$0xff]
        %v208 = vld [vmem:[#allocation3 + $0x68] sm:$0xff]
        %v209 = vld [vmem:[#allocation3 + $0x70] sm:$0xff]
        %v210 = vld [vmem:[#allocation3 + $0x78] sm:$0xff]
        %v211 = vld [vmem:[#allocation3 + $0x80] sm:$0xff]
        %v212 = vld [vmem:[#allocation3 + $0x88] sm:$0xff]
        %v213 = vld [vmem:[#allocation3 + $0x90] sm:$0xff]
        %v214 = vld [vmem:[#allocation3 + $0x98] sm:$0xff]
        %v215 = vld [vmem:[#allocation3 + $0xa0] sm:$0xff]
        %v216 = vld [vmem:[#allocation3 + $0xa8] sm:$0xff]
        %v217 = vld [vmem:[#allocation3 + $0xb0] sm:$0xff]
        %v218 = vld [vmem:[#allocation3 + $0xb8] sm:$0xff]
        %v219 = vld [vmem:[#allocation3 + $0xc0] sm:$0xff]
        %v220 = vld [vmem:[#allocation3 + $0xc8] sm:$0xff]
        %v221 = vld [vmem:[#allocation3 + $0xd0] sm:$0xff]
        %v222 = vld [vmem:[#allocation3 + $0xd8] sm:$0xff]
        %v223 = vld [vmem:[#allocation3 + $0xe0] sm:$0xff]
        %v224 = vld [vmem:[#allocation3 + $0xe8] sm:$0xff]
        %v225 = vld [vmem:[#allocation3 + $0xf0] sm:$0xff]
        %v226 = vld [vmem:[#allocation3 + $0xf8] sm:$0xff]
        %v227 = vld [vmem:[#allocation3 + $0x100] sm:$0xff]
        %v228 = vld [vmem:[#allocation3 + $0x108] sm:$0xff]
        %v229 = vld [vmem:[#allocation3 + $0x110] sm:$0xff]
        %v230 = vld [vmem:[#allocation3 + $0x118] sm:$0xff]
        %v231 = vld [vmem:[#allocation3 + $0x120] sm:$0xff]
        %v232 = vld [vmem:[#allocation3 + $0x128] sm:$0xff]
        %v233 = vld [vmem:[#allocation3 + $0x130] sm:$0xff]
        %v234 = vld [vmem:[#allocation3 + $0x138] sm:$0xff]
        %v235 = vld [vmem:[#allocation3 + $0x140] sm:$0xff]
        %v236 = vld [vmem:[#allocation3 + $0x148] sm:$0xff]
        %v237 = vld [vmem:[#allocation3 + $0x150] sm:$0xff]
        %v238 = vld [vmem:[#allocation3 + $0x158] sm:$0xff]
        %v239 = vld [vmem:[#allocation3 + $0x160] sm:$0xff]
        %v240 = vld [vmem:[#allocation3 + $0x168] sm:$0xff]
        %v241 = vld [vmem:[#allocation3 + $0x170] sm:$0xff]
        %v242 = vld [vmem:[#allocation3 + $0x178] sm:$0xff]
        %v243 = vld [vmem:[#allocation3 + $0x180] sm:$0xff]
        %v244 = vld [vmem:[#allocation3 + $0x188] sm:$0xff]
        %v245 = vld [vmem:[#allocation3 + $0x190] sm:$0xff]
        %v246 = vld [vmem:[#allocation3 + $0x198] sm:$0xff]
        %v247 = vld [vmem:[#allocation3 + $0x1a0] sm:$0xff]
        %v248 = vld [vmem:[#allocation3 + $0x1a8] sm:$0xff]
        %v249 = vld [vmem:[#allocation3 + $0x1b0] sm:$0xff]
        %v250 = vld [vmem:[#allocation3 + $0x1b8] sm:$0xff]
        %v251 = vld [vmem:[#allocation3 + $0x1c0] sm:$0xff]
        %v252 = vld [vmem:[#allocation3 + $0x1c8] sm:$0xff]
        %v253 = vld [vmem:[#allocation3 + $0x1d0] sm:$0xff]
        %v254 = vld [vmem:[#allocation3 + $0x1d8] sm:$0xff]
        %v255 = vld [vmem:[#allocation3 + $0x1e0] sm:$0xff]
        %v256 = vld [vmem:[#allocation3 + $0x1e8] sm:$0xff]
        %v257 = vld [vmem:[#allocation3 + $0x1f0] sm:$0xff]
        %v258 = vld [vmem:[#allocation3 + $0x1f8] sm:$0xff]
        %v259 = vld [vmem:[#allocation3 + $0x200] sm:$0xff]
        %v260 = vld [vmem:[#allocation3 + $0x208] sm:$0xff]
        %v261 = vld [vmem:[#allocation3 + $0x210] sm:$0xff]
        %v262 = vld [vmem:[#allocation3 + $0x218] sm:$0xff]
        %v263 = vld [vmem:[#allocation3 + $0x220] sm:$0xff]
        %v264 = vld [vmem:[#allocation3 + $0x228] sm:$0xff]
        %v265 = vld [vmem:[#allocation3 + $0x230] sm:$0xff]
        %v266 = vld [vmem:[#allocation3 + $0x238] sm:$0xff]
        %v267 = vld [vmem:[#allocation3 + $0x240] sm:$0xff]
        %v268 = vld [vmem:[#allocation3 + $0x248] sm:$0xff]
        %v269 = vld [vmem:[#allocation3 + $0x250] sm:$0xff]
        %v270 = vld [vmem:[#allocation3 + $0x258] sm:$0xff]
        %v271 = vld [vmem:[#allocation3 + $0x260] sm:$0xff]
        %v272 = vld [vmem:[#allocation3 + $0x268] sm:$0xff]
        %v273 = vld [vmem:[#allocation3 + $0x270] sm:$0xff]
        %v274 = vld [vmem:[#allocation3 + $0x278] sm:$0xff]
        %v275 = vld [vmem:[#allocation3 + $0x280] sm:$0xff]
        %v276 = vld [vmem:[#allocation3 + $0x288] sm:$0xff]
        %v277 = vld [vmem:[#allocation3 + $0x290] sm:$0xff]
        %v278 = vld [vmem:[#allocation3 + $0x298] sm:$0xff]
        %v279 = vld [vmem:[#allocation3 + $0x2a0] sm:$0xff]
        %v280 = vld [vmem:[#allocation3 + $0x2a8] sm:$0xff]
        %v281 = vld [vmem:[#allocation3 + $0x2b0] sm:$0xff]
        %v282 = vld [vmem:[#allocation3 + $0x2b8] sm:$0xff]
        %v283 = vld [vmem:[#allocation3 + $0x2c0] sm:$0xff]
        %v284 = vld [vmem:[#allocation3 + $0x2c8] sm:$0xff]
        %v285 = vld [vmem:[#allocation3 + $0x2d0] sm:$0xff]
        %v286 = vld [vmem:[#allocation3 + $0x2d8] sm:$0xff]
        %v287 = vld [vmem:[#allocation3 + $0x2e0] sm:$0xff]
        %v288 = vld [vmem:[#allocation3 + $0x2e8] sm:$0xff]
        %v289 = vld [vmem:[#allocation3 + $0x2f0] sm:$0xff]
        %v290 = vld [vmem:[#allocation3 + $0x2f8] sm:$0xff]
        %v387 = vunpack.c.l.b16 %v195
        %v388 = vunpack.c.h.b16 %v195
        %v389 = vunpack.c.l.b16 %v196
        %v390 = vunpack.c.h.b16 %v196
        %v391 = vunpack.c.l.b16 %v197
        %v392 = vunpack.c.h.b16 %v197
        %v393 = vunpack.c.l.b16 %v198
        %v394 = vunpack.c.h.b16 %v198
        %v395 = vunpack.c.l.b16 %v199
        %v396 = vunpack.c.h.b16 %v199
        %v397 = vunpack.c.l.b16 %v200
        %v398 = vunpack.c.h.b16 %v200
        %v399 = vunpack.c.l.b16 %v201
        %v400 = vunpack.c.h.b16 %v201
        %v401 = vunpack.c.l.b16 %v202
        %v402 = vunpack.c.h.b16 %v202
        %v403 = vunpack.c.l.b16 %v203
        %v404 = vunpack.c.h.b16 %v203
        %v405 = vunpack.c.l.b16 %v204
        %v406 = vunpack.c.h.b16 %v204
        %v407 = vunpack.c.l.b16 %v205
        %v408 = vunpack.c.h.b16 %v205
        %v409 = vunpack.c.l.b16 %v206
        %v410 = vunpack.c.h.b16 %v206
        %v411 = vunpack.c.l.b16 %v207
        %v412 = vunpack.c.h.b16 %v207
        %v413 = vunpack.c.l.b16 %v208
        %v414 = vunpack.c.h.b16 %v208
        %v415 = vunpack.c.l.b16 %v209
        %v416 = vunpack.c.h.b16 %v209
        %v417 = vunpack.c.l.b16 %v210
        %v418 = vunpack.c.h.b16 %v210
        %v419 = vunpack.c.l.b16 %v211
        %v420 = vunpack.c.h.b16 %v211
        %v421 = vunpack.c.l.b16 %v212
        %v422 = vunpack.c.h.b16 %v212
        %v423 = vunpack.c.l.b16 %v213
        %v424 = vunpack.c.h.b16 %v213
        %v425 = vunpack.c.l.b16 %v214
        %v426 = vunpack.c.h.b16 %v214
        %v427 = vunpack.c.l.b16 %v215
        %v428 = vunpack.c.h.b16 %v215
        %v429 = vunpack.c.l.b16 %v216
        %v430 = vunpack.c.h.b16 %v216
        %v431 = vunpack.c.l.b16 %v217
        %v432 = vunpack.c.h.b16 %v217
        %v433 = vunpack.c.l.b16 %v218
        %v434 = vunpack.c.h.b16 %v218
        %v435 = vunpack.c.l.b16 %v219
        %v436 = vunpack.c.h.b16 %v219
        %v437 = vunpack.c.l.b16 %v220
        %v438 = vunpack.c.h.b16 %v220
        %v439 = vunpack.c.l.b16 %v221
        %v440 = vunpack.c.h.b16 %v221
        %v441 = vunpack.c.l.b16 %v222
        %v442 = vunpack.c.h.b16 %v222
        %v443 = vunpack.c.l.b16 %v223
        %v444 = vunpack.c.h.b16 %v223
        %v445 = vunpack.c.l.b16 %v224
        %v446 = vunpack.c.h.b16 %v224
        %v447 = vunpack.c.l.b16 %v225
        %v448 = vunpack.c.h.b16 %v225
        %v449 = vunpack.c.l.b16 %v226
        %v450 = vunpack.c.h.b16 %v226
        %v451 = vunpack.c.l.b16 %v227
        %v452 = vunpack.c.h.b16 %v227
        %v453 = vunpack.c.l.b16 %v228
        %v454 = vunpack.c.h.b16 %v228
        %v455 = vunpack.c.l.b16 %v229
        %v456 = vunpack.c.h.b16 %v229
        %v457 = vunpack.c.l.b16 %v230
        %v458 = vunpack.c.h.b16 %v230
        %v459 = vunpack.c.l.b16 %v231
        %v460 = vunpack.c.h.b16 %v231
        %v461 = vunpack.c.l.b16 %v232
        %v462 = vunpack.c.h.b16 %v232
        %v463 = vunpack.c.l.b16 %v233
        %v464 = vunpack.c.h.b16 %v233
        %v465 = vunpack.c.l.b16 %v234
        %v466 = vunpack.c.h.b16 %v234
        %v467 = vunpack.c.l.b16 %v235
        %v468 = vunpack.c.h.b16 %v235
        %v469 = vunpack.c.l.b16 %v236
        %v470 = vunpack.c.h.b16 %v236
        %v471 = vunpack.c.l.b16 %v237
        %v472 = vunpack.c.h.b16 %v237
        %v473 = vunpack.c.l.b16 %v238
        %v474 = vunpack.c.h.b16 %v238
        %v475 = vunpack.c.l.b16 %v239
        %v476 = vunpack.c.h.b16 %v239
        %v477 = vunpack.c.l.b16 %v240
        %v478 = vunpack.c.h.b16 %v240
        %v479 = vunpack.c.l.b16 %v241
        %v480 = vunpack.c.h.b16 %v241
        %v481 = vunpack.c.l.b16 %v242
        %v482 = vunpack.c.h.b16 %v242
        %v483 = vunpack.c.l.b16 %v243
        %v484 = vunpack.c.h.b16 %v243
        %v485 = vunpack.c.l.b16 %v244
        %v486 = vunpack.c.h.b16 %v244
        %v487 = vunpack.c.l.b16 %v245
        %v488 = vunpack.c.h.b16 %v245
        %v489 = vunpack.c.l.b16 %v246
        %v490 = vunpack.c.h.b16 %v246
        %v491 = vunpack.c.l.b16 %v247
        %v492 = vunpack.c.h.b16 %v247
        %v493 = vunpack.c.l.b16 %v248
        %v494 = vunpack.c.h.b16 %v248
        %v495 = vunpack.c.l.b16 %v249
        %v496 = vunpack.c.h.b16 %v249
        %v497 = vunpack.c.l.b16 %v250
        %v498 = vunpack.c.h.b16 %v250
        %v499 = vunpack.c.l.b16 %v251
        %v500 = vunpack.c.h.b16 %v251
        %v501 = vunpack.c.l.b16 %v252
        %v502 = vunpack.c.h.b16 %v252
        %v503 = vunpack.c.l.b16 %v253
        %v504 = vunpack.c.h.b16 %v253
        %v505 = vunpack.c.l.b16 %v254
        %v506 = vunpack.c.h.b16 %v254
        %v507 = vunpack.c.l.b16 %v255
        %v508 = vunpack.c.h.b16 %v255
        %v509 = vunpack.c.l.b16 %v256
        %v510 = vunpack.c.h.b16 %v256
        %v511 = vunpack.c.l.b16 %v257
        %v512 = vunpack.c.h.b16 %v257
        %v513 = vunpack.c.l.b16 %v258
        %v514 = vunpack.c.h.b16 %v258
        %v515 = vunpack.c.l.b16 %v259
        %v516 = vunpack.c.h.b16 %v259
        %v517 = vunpack.c.l.b16 %v260
        %v518 = vunpack.c.h.b16 %v260
        %v519 = vunpack.c.l.b16 %v261
        %v520 = vunpack.c.h.b16 %v261
        %v521 = vunpack.c.l.b16 %v262
        %v522 = vunpack.c.h.b16 %v262
        %v523 = vunpack.c.l.b16 %v263
        %v524 = vunpack.c.h.b16 %v263
        %v525 = vunpack.c.l.b16 %v264
        %v526 = vunpack.c.h.b16 %v264
        %v527 = vunpack.c.l.b16 %v265
        %v528 = vunpack.c.h.b16 %v265
        %v529 = vunpack.c.l.b16 %v266
        %v530 = vunpack.c.h.b16 %v266
        %v531 = vunpack.c.l.b16 %v267
        %v532 = vunpack.c.h.b16 %v267
        %v533 = vunpack.c.l.b16 %v268
        %v534 = vunpack.c.h.b16 %v268
        %v535 = vunpack.c.l.b16 %v269
        %v536 = vunpack.c.h.b16 %v269
        %v537 = vunpack.c.l.b16 %v270
        %v538 = vunpack.c.h.b16 %v270
        %v539 = vunpack.c.l.b16 %v271
        %v540 = vunpack.c.h.b16 %v271
        %v541 = vunpack.c.l.b16 %v272
        %v542 = vunpack.c.h.b16 %v272
        %v543 = vunpack.c.l.b16 %v273
        %v544 = vunpack.c.h.b16 %v273
        %v545 = vunpack.c.l.b16 %v274
        %v546 = vunpack.c.h.b16 %v274
        %v547 = vunpack.c.l.b16 %v275
        %v548 = vunpack.c.h.b16 %v275
        %v549 = vunpack.c.l.b16 %v276
        %v550 = vunpack.c.h.b16 %v276
        %v551 = vunpack.c.l.b16 %v277
        %v552 = vunpack.c.h.b16 %v277
        %v553 = vunpack.c.l.b16 %v278
        %v554 = vunpack.c.h.b16 %v278
        %v555 = vunpack.c.l.b16 %v279
        %v556 = vunpack.c.h.b16 %v279
        %v557 = vunpack.c.l.b16 %v280
        %v558 = vunpack.c.h.b16 %v280
        %v559 = vunpack.c.l.b16 %v281
        %v560 = vunpack.c.h.b16 %v281
        %v561 = vunpack.c.l.b16 %v282
        %v562 = vunpack.c.h.b16 %v282
        %v563 = vunpack.c.l.b16 %v283
        %v564 = vunpack.c.h.b16 %v283
        %v565 = vunpack.c.l.b16 %v284
        %v566 = vunpack.c.h.b16 %v284
        %v567 = vunpack.c.l.b16 %v285
        %v568 = vunpack.c.h.b16 %v285
        %v569 = vunpack.c.l.b16 %v286
        %v570 = vunpack.c.h.b16 %v286
        %v571 = vunpack.c.l.b16 %v287
        %v572 = vunpack.c.h.b16 %v287
        %v573 = vunpack.c.l.b16 %v288
        %v574 = vunpack.c.h.b16 %v288
        %v575 = vunpack.c.l.b16 %v289
        %v576 = vunpack.c.h.b16 %v289
        %v577 = vunpack.c.l.b16 %v290
        %v578 = vunpack.c.h.b16 %v290
        %v579 = vpack.c.b16 %v393, %v387
        %v580 = vpack.c.b16 %v394, %v388
        %v581 = vpack.c.b16 %v395, %v389
        %v582 = vpack.c.b16 %v396, %v390
        %v583 = vpack.c.b16 %v397, %v391
        %v584 = vpack.c.b16 %v398, %v392
        %v585 = vpack.c.b16 %v405, %v399
        %v586 = vpack.c.b16 %v406, %v400
        %v587 = vpack.c.b16 %v407, %v401
        %v588 = vpack.c.b16 %v408, %v402
        %v589 = vpack.c.b16 %v409, %v403
        %v590 = vpack.c.b16 %v410, %v404
        %v591 = vpack.c.b16 %v417, %v411
        %v592 = vpack.c.b16 %v418, %v412
        %v593 = vpack.c.b16 %v419, %v413
        %v594 = vpack.c.b16 %v420, %v414
        %v595 = vpack.c.b16 %v421, %v415
        %v596 = vpack.c.b16 %v422, %v416
        %v597 = vpack.c.b16 %v429, %v423
        %v598 = vpack.c.b16 %v430, %v424
        %v599 = vpack.c.b16 %v431, %v425
        %v600 = vpack.c.b16 %v432, %v426
        %v601 = vpack.c.b16 %v433, %v427
        %v602 = vpack.c.b16 %v434, %v428
        %v603 = vpack.c.b16 %v441, %v435
        %v604 = vpack.c.b16 %v442, %v436
        %v605 = vpack.c.b16 %v443, %v437
        %v606 = vpack.c.b16 %v444, %v438
        %v607 = vpack.c.b16 %v445, %v439
        %v608 = vpack.c.b16 %v446, %v440
        %v609 = vpack.c.b16 %v453, %v447
        %v610 = vpack.c.b16 %v454, %v448
        %v611 = vpack.c.b16 %v455, %v449
        %v612 = vpack.c.b16 %v456, %v450
        %v613 = vpack.c.b16 %v457, %v451
        %v614 = vpack.c.b16 %v458, %v452
        %v615 = vpack.c.b16 %v465, %v459
        %v616 = vpack.c.b16 %v466, %v460
        %v617 = vpack.c.b16 %v467, %v461
        %v618 = vpack.c.b16 %v468, %v462
        %v619 = vpack.c.b16 %v469, %v463
        %v620 = vpack.c.b16 %v470, %v464
        %v621 = vpack.c.b16 %v477, %v471
        %v622 = vpack.c.b16 %v478, %v472
        %v623 = vpack.c.b16 %v479, %v473
        %v624 = vpack.c.b16 %v480, %v474
        %v625 = vpack.c.b16 %v481, %v475
        %v626 = vpack.c.b16 %v482, %v476
        %v627 = vpack.c.b16 %v489, %v483
        %v628 = vpack.c.b16 %v490, %v484
        %v629 = vpack.c.b16 %v491, %v485
        %v630 = vpack.c.b16 %v492, %v486
        %v631 = vpack.c.b16 %v493, %v487
        %v632 = vpack.c.b16 %v494, %v488
        %v633 = vpack.c.b16 %v501, %v495
        %v634 = vpack.c.b16 %v502, %v496
        %v635 = vpack.c.b16 %v503, %v497
        %v636 = vpack.c.b16 %v504, %v498
        %v637 = vpack.c.b16 %v505, %v499
        %v638 = vpack.c.b16 %v506, %v500
        %v639 = vpack.c.b16 %v513, %v507
        %v640 = vpack.c.b16 %v514, %v508
        %v641 = vpack.c.b16 %v515, %v509
        %v642 = vpack.c.b16 %v516, %v510
        %v643 = vpack.c.b16 %v517, %v511
        %v644 = vpack.c.b16 %v518, %v512
        %v645 = vpack.c.b16 %v525, %v519
        %v646 = vpack.c.b16 %v526, %v520
        %v647 = vpack.c.b16 %v527, %v521
        %v648 = vpack.c.b16 %v528, %v522
        %v649 = vpack.c.b16 %v529, %v523
        %v650 = vpack.c.b16 %v530, %v524
        %v651 = vpack.c.b16 %v537, %v531
        %v652 = vpack.c.b16 %v538, %v532
        %v653 = vpack.c.b16 %v539, %v533
        %v654 = vpack.c.b16 %v540, %v534
        %v655 = vpack.c.b16 %v541, %v535
        %v656 = vpack.c.b16 %v542, %v536
        %v657 = vpack.c.b16 %v549, %v543
        %v658 = vpack.c.b16 %v550, %v544
        %v659 = vpack.c.b16 %v551, %v545
        %v660 = vpack.c.b16 %v552, %v546
        %v661 = vpack.c.b16 %v553, %v547
        %v662 = vpack.c.b16 %v554, %v548
        %v663 = vpack.c.b16 %v561, %v555
        %v664 = vpack.c.b16 %v562, %v556
        %v665 = vpack.c.b16 %v563, %v557
        %v666 = vpack.c.b16 %v564, %v558
        %v667 = vpack.c.b16 %v565, %v559
        %v668 = vpack.c.b16 %v566, %v560
        %v669 = vpack.c.b16 %v573, %v567
        %v670 = vpack.c.b16 %v574, %v568
        %v671 = vpack.c.b16 %v575, %v569
        %v672 = vpack.c.b16 %v576, %v570
        %v673 = vpack.c.b16 %v577, %v571
        %v674 = vpack.c.b16 %v578, %v572
        %771 = vmatprep.subr.bf16.mxu0 %v580
        %772 = vmatpush1.bf16.msra.mxu0 %v579
        %773 = vmatprep.subr.bf16.mxu0 %v586
        %774 = vmatpush1.bf16.msra.mxu0 %v585
        %775 = vmatprep.subr.bf16.mxu0 %v592
        %776 = vmatpush1.bf16.msra.mxu0 %v591
        %777 = vmatprep.subr.bf16.mxu0 %v598
        %778 = vmatpush1.bf16.msra.mxu0 %v597
        %779 = vmatprep.subr.bf16.mxu0 %v604
        %780 = vmatpush1.bf16.msra.mxu0 %v603
        %781 = vmatprep.subr.bf16.mxu0 %v610
        %782 = vmatpush1.bf16.msra.mxu0 %v609
        %783 = vmatprep.subr.bf16.mxu0 %v616
        %784 = vmatpush1.bf16.msra.mxu0 %v615
        %785 = vmatprep.subr.bf16.mxu0 %v622
        %786 = vmatpush1.bf16.msra.mxu0 %v621
        %787 = vmatprep.subr.bf16.mxu0 %v628
        %788 = vmatpush1.bf16.msra.mxu0 %v627
        %789 = vmatprep.subr.bf16.mxu0 %v634
        %790 = vmatpush1.bf16.msra.mxu0 %v633
        %791 = vmatprep.subr.bf16.mxu0 %v640
        %792 = vmatpush1.bf16.msra.mxu0 %v639
        %793 = vmatprep.subr.bf16.mxu0 %v646
        %794 = vmatpush1.bf16.msra.mxu0 %v645
        %795 = vmatprep.subr.bf16.mxu0 %v652
        %796 = vmatpush1.bf16.msra.mxu0 %v651
        %797 = vmatprep.subr.bf16.mxu0 %v658
        %798 = vmatpush1.bf16.msra.mxu0 %v657
        %799 = vmatprep.subr.bf16.mxu0 %v664
        %800 = vmatpush1.bf16.msra.mxu0 %v663
        %801 = vmatprep.subr.bf16.mxu0 %v670
        %802 = vmatpush1.bf16.msra.mxu0 %v669
        %803 = vmatprep.mubr.bf16.mxu0 %v194
        %804 = vmatmul.mubr.bf16.gmra.mrb[0].mxu0 %v193
        %v805 = vpop.f32.mrb[0].mxu0
        %v806 = vadd.f32 0.0, %v805
        %v807 = vpop.f32.mrb[0].mxu0
        %v808 = vadd.f32 0.0, %v807
        %v809 = vpop.f32.mrb[0].mxu0
        %v810 = vpop.f32.mrb[0].mxu0
        %811 = vdwg.mxu0
        %812 = vmatprep.subr.bf16.mxu0 %v582
        %813 = vmatpush1.bf16.msra.mxu0 %v581
        %814 = vmatprep.subr.bf16.mxu0 %v588
        %815 = vmatpush1.bf16.msra.mxu0 %v587
        %816 = vmatprep.subr.bf16.mxu0 %v594
        %817 = vmatpush1.bf16.msra.mxu0 %v593
        %818 = vmatprep.subr.bf16.mxu0 %v600
        %819 = vmatpush1.bf16.msra.mxu0 %v599
        %820 = vmatprep.subr.bf16.mxu0 %v606
        %821 = vmatpush1.bf16.msra.mxu0 %v605
        %822 = vmatprep.subr.bf16.mxu0 %v612
        %823 = vmatpush1.bf16.msra.mxu0 %v611
        %824 = vmatprep.subr.bf16.mxu0 %v618
        %825 = vmatpush1.bf16.msra.mxu0 %v617
        %826 = vmatprep.subr.bf16.mxu0 %v624
        %827 = vmatpush1.bf16.msra.mxu0 %v623
        %828 = vmatprep.subr.bf16.mxu0 %v630
        %829 = vmatpush1.bf16.msra.mxu0 %v629
        %830 = vmatprep.subr.bf16.mxu0 %v636
        %831 = vmatpush1.bf16.msra.mxu0 %v635
        %832 = vmatprep.subr.bf16.mxu0 %v642
        %833 = vmatpush1.bf16.msra.mxu0 %v641
        %834 = vmatprep.subr.bf16.mxu0 %v648
        %835 = vmatpush1.bf16.msra.mxu0 %v647
        %836 = vmatprep.subr.bf16.mxu0 %v654
        %837 = vmatpush1.bf16.msra.mxu0 %v653
        %838 = vmatprep.subr.bf16.mxu0 %v660
        %839 = vmatpush1.bf16.msra.mxu0 %v659
        %840 = vmatprep.subr.bf16.mxu0 %v666
        %841 = vmatpush1.bf16.msra.mxu0 %v665
        %842 = vmatprep.subr.bf16.mxu0 %v672
        %843 = vmatpush1.bf16.msra.mxu0 %v671
        %844 = vmatprep.mubr.bf16.mxu0 %v194
        %845 = vmatmul.mubr.bf16.gmra.mrb[0].mxu0 %v193
        %v846 = vpop.f32.mrb[0].mxu0
        %v847 = vadd.f32 0.0, %v846
        %v848 = vpop.f32.mrb[0].mxu0
        %v849 = vadd.f32 0.0, %v848
        %v850 = vpop.f32.mrb[0].mxu0
        %v851 = vpop.f32.mrb[0].mxu0
        %852 = vdwg.mxu0
        %853 = vmatprep.subr.bf16.mxu0 %v584
        %854 = vmatpush1.bf16.msra.mxu0 %v583
        %855 = vmatprep.subr.bf16.mxu0 %v590
        %856 = vmatpush1.bf16.msra.mxu0 %v589
        %857 = vmatprep.subr.bf16.mxu0 %v596
        %858 = vmatpush1.bf16.msra.mxu0 %v595
        %859 = vmatprep.subr.bf16.mxu0 %v602
        %860 = vmatpush1.bf16.msra.mxu0 %v601
        %861 = vmatprep.subr.bf16.mxu0 %v608
        %862 = vmatpush1.bf16.msra.mxu0 %v607
        %863 = vmatprep.subr.bf16.mxu0 %v614
        %864 = vmatpush1.bf16.msra.mxu0 %v613
        %865 = vmatprep.subr.bf16.mxu0 %v620
        %866 = vmatpush1.bf16.msra.mxu0 %v619
        %867 = vmatprep.subr.bf16.mxu0 %v626
        %868 = vmatpush1.bf16.msra.mxu0 %v625
        %869 = vmatprep.subr.bf16.mxu0 %v632
        %870 = vmatpush1.bf16.msra.mxu0 %v631
        %871 = vmatprep.subr.bf16.mxu0 %v638
        %872 = vmatpush1.bf16.msra.mxu0 %v637
        %873 = vmatprep.subr.bf16.mxu0 %v644
        %874 = vmatpush1.bf16.msra.mxu0 %v643
        %875 = vmatprep.subr.bf16.mxu0 %v650
        %876 = vmatpush1.bf16.msra.mxu0 %v649
        %877 = vmatprep.subr.bf16.mxu0 %v656
        %878 = vmatpush1.bf16.msra.mxu0 %v655
        %879 = vmatprep.subr.bf16.mxu0 %v662
        %880 = vmatpush1.bf16.msra.mxu0 %v661
        %881 = vmatprep.subr.bf16.mxu0 %v668
        %882 = vmatpush1.bf16.msra.mxu0 %v667
        %883 = vmatprep.subr.bf16.mxu0 %v674
        %884 = vmatpush1.bf16.msra.mxu0 %v673
        %885 = vmatprep.mubr.bf16.mxu0 %v194
        %886 = vmatmul.mubr.bf16.gmra.mrb[0].mxu0 %v193
        %v887 = vpop.f32.mrb[0].mxu0
        %v888 = vadd.f32 0.0, %v887
        %v889 = vpop.f32.mrb[0].mxu0
        %v890 = vadd.f32 0.0, %v889
        %v891 = vpop.f32.mrb[0].mxu0
        %v892 = vpop.f32.mrb[0].mxu0
        %893 = vdwg.mxu0
        %v894 = vpack.c.bf16 %v806, %v806
        %v895 = vpack.c.bf16 %v808, %v808
        %v896 = vpack.c.bf16 %v847, %v847
        %v897 = vpack.c.bf16 %v849, %v849
        %v898 = vpack.c.bf16 %v888, %v888
        %v899 = vpack.c.bf16 %v890, %v890
        %900 = vxpose.xlu0.c.b16.start [1/8] %v894, 128
        %901 = vxpose.xlu0.c.b16.cont [2/8] 0, 128
        %902 = vxpose.xlu0.c.b16.cont [3/8] 0, 128
        %903 = vxpose.xlu0.c.b16.cont [4/8] 0, 128
        %904 = vxpose.xlu0.c.b16.cont [5/8] 0, 128
        %905 = vxpose.xlu0.c.b16.cont [6/8] 0, 128
        %906 = vxpose.xlu0.c.b16.cont [7/8] 0, 128
        %907 = vxpose.xlu0.c.b16.end [8/8] 0, 128
        %v908 = vpop.trf.xlu0
        %v909 = vpop.trf.xlu0
        %v910 = vpop.trf.xlu0
        %v911 = vpop.trf.xlu0
        %v912 = vpop.trf.xlu0
        %v913 = vpop.trf.xlu0
        %v914 = vpop.trf.xlu0
        %v915 = vpop.trf.xlu0
        %916 = vxpose.xlu0.c.b16.start [1/8] %v895, 128
        %917 = vxpose.xlu0.c.b16.cont [2/8] 0, 128
        %918 = vxpose.xlu0.c.b16.cont [3/8] 0, 128
        %919 = vxpose.xlu0.c.b16.cont [4/8] 0, 128
        %920 = vxpose.xlu0.c.b16.cont [5/8] 0, 128
        %921 = vxpose.xlu0.c.b16.cont [6/8] 0, 128
        %922 = vxpose.xlu0.c.b16.cont [7/8] 0, 128
        %923 = vxpose.xlu0.c.b16.end [8/8] 0, 128
        %v924 = vpop.trf.xlu0
        %v925 = vpop.trf.xlu0
        %v926 = vpop.trf.xlu0
        %v927 = vpop.trf.xlu0
        %v928 = vpop.trf.xlu0
        %v929 = vpop.trf.xlu0
        %v930 = vpop.trf.xlu0
        %v931 = vpop.trf.xlu0
        %vm932 = vcmask 31744
        %v934 = vsel %vm932, %v908, 0
        %v937 = vsel %vm932, %v909, 0
        %v940 = vsel %vm932, %v910, 0
        %v943 = vsel %vm932, %v911, 0
        %v946 = vsel %vm932, %v912, 0
        %v949 = vsel %vm932, %v913, 0
        %v952 = vsel %vm932, %v914, 0
        %v955 = vsel %vm932, %v915, 0
        %v958 = vsel %vm932, %v924, 0
        %v961 = vsel %vm932, %v925, 0
        %v964 = vsel %vm932, %v926, 0
        %v967 = vsel %vm932, %v927, 0
        %v970 = vsel %vm932, %v928, 0
        %v973 = vsel %vm932, %v929, 0
        %v976 = vsel %vm932, %v930, 0
        %v979 = vsel %vm932, %v931, 0
        %vm981 = vcmask 1041408
        %v983 = vsel %vm981, %v896, 0
        %v986 = vsel %vm981, %v897, 0
        %988 = vmatprep.subr.bf16.mxu0 %v986
        %989 = vmatpush1.bf16.msra.mxu0 %v983
        %990 = vmatprep.subr.bf16.mxu0 0
        %991 = vmatpush1.bf16.msra.mxu0 0
        %992 = vmatprep.subr.bf16.mxu0 0
        %993 = vmatpush1.bf16.msra.mxu0 0
        %994 = vmatprep.subr.bf16.mxu0 0
        %995 = vmatpush1.bf16.msra.mxu0 0
        %996 = vmatprep.subr.bf16.mxu0 0
        %997 = vmatpush1.bf16.msra.mxu0 0
        %998 = vmatprep.subr.bf16.mxu0 0
        %999 = vmatpush1.bf16.msra.mxu0 0
        %1000 = vmatprep.subr.bf16.mxu0 0
        %1001 = vmatpush1.bf16.msra.mxu0 0
        %1002 = vmatprep.subr.bf16.mxu0 0
        %1003 = vmatpush1.bf16.msra.mxu0 0
        %1004 = vmatprep.subr.bf16.mxu0 0
        %1005 = vmatpush1.bf16.msra.mxu0 0
        %1006 = vmatprep.subr.bf16.mxu0 0
        %1007 = vmatpush1.bf16.msra.mxu0 0
        %1008 = vmatprep.subr.bf16.mxu0 0
        %1009 = vmatpush1.bf16.msra.mxu0 0
        %1010 = vmatprep.subr.bf16.mxu0 0
        %1011 = vmatpush1.bf16.msra.mxu0 0
        %1012 = vmatprep.subr.bf16.mxu0 0
        %1013 = vmatpush1.bf16.msra.mxu0 0
        %1014 = vmatprep.subr.bf16.mxu0 0
        %1015 = vmatpush1.bf16.msra.mxu0 0
        %1016 = vmatprep.subr.bf16.mxu0 0
        %1017 = vmatpush1.bf16.msra.mxu0 0
        %1018 = vmatprep.subr.bf16.mxu0 0
        %1019 = vmatpush1.bf16.msra.mxu0 0
        %1020 = vmatprep.mubr.bf16.mxu0 0
        %1021 = vmatmul.mubr.bf16.gmra.mrb[0].mxu0 %v934
        %v1022 = vpop.f32.mrb[0].mxu0
        %v1023 = vadd.f32 0.0, %v1022
        %v1024 = vpop.f32.mrb[0].mxu0
        %v1025 = vadd.f32 0.0, %v1024
        %v1026 = vpop.f32.mrb[0].mxu0
        %v1027 = vadd.f32 0.0, %v1026
        %v1028 = vpop.f32.mrb[0].mxu0
        %v1029 = vadd.f32 0.0, %v1028
        %1030 = vmatprep.mubr.bf16.mxu0 0
        %1031 = vmatmul.mubr.bf16.gmra.mrb[0].mxu0 %v937
        %v1032 = vpop.f32.mrb[0].mxu0
        %v1033 = vadd.f32 0.0, %v1032
        %v1034 = vpop.f32.mrb[0].mxu0
        %v1035 = vadd.f32 0.0, %v1034
        %v1036 = vpop.f32.mrb[0].mxu0
        %v1037 = vadd.f32 0.0, %v1036
        %v1038 = vpop.f32.mrb[0].mxu0
        %v1039 = vadd.f32 0.0, %v1038
        %1040 = vmatprep.mubr.bf16.mxu0 0
        %1041 = vmatmul.mubr.bf16.gmra.mrb[0].mxu0 %v940
        %v1042 = vpop.f32.mrb[0].mxu0
        %v1043 = vadd.f32 0.0, %v1042
        %v1044 = vpop.f32.mrb[0].mxu0
        %v1045 = vadd.f32 0.0, %v1044
        %v1046 = vpop.f32.mrb[0].mxu0
        %v1047 = vadd.f32 0.0, %v1046
        %v1048 = vpop.f32.mrb[0].mxu0
        %v1049 = vadd.f32 0.0, %v1048
        %1050 = vmatprep.mubr.bf16.mxu0 0
        %1051 = vmatmul.mubr.bf16.gmra.mrb[0].mxu0 %v943
        %v1052 = vpop.f32.mrb[0].mxu0
        %v1053 = vadd.f32 0.0, %v1052
        %v1054 = vpop.f32.mrb[0].mxu0
        %v1055 = vadd.f32 0.0, %v1054
        %v1056 = vpop.f32.mrb[0].mxu0
        %v1057 = vadd.f32 0.0, %v1056
        %v1058 = vpop.f32.mrb[0].mxu0
        %v1059 = vadd.f32 0.0, %v1058
        %1060 = vmatprep.mubr.bf16.mxu0 0
        %1061 = vmatmul.mubr.bf16.gmra.mrb[0].mxu0 %v946
        %v1062 = vpop.f32.mrb[0].mxu0
        %v1063 = vadd.f32 0.0, %v1062
        %v1064 = vpop.f32.mrb[0].mxu0
        %v1065 = vadd.f32 0.0, %v1064
        %v1066 = vpop.f32.mrb[0].mxu0
        %v1067 = vadd.f32 0.0, %v1066
        %v1068 = vpop.f32.mrb[0].mxu0
        %v1069 = vadd.f32 0.0, %v1068
        %1070 = vmatprep.mubr.bf16.mxu0 0
        %1071 = vmatmul.mubr.bf16.gmra.mrb[0].mxu0 %v949
        %v1072 = vpop.f32.mrb[0].mxu0
        %v1073 = vadd.f32 0.0, %v1072
        %v1074 = vpop.f32.mrb[0].mxu0
        %v1075 = vadd.f32 0.0, %v1074
        %v1076 = vpop.f32.mrb[0].mxu0
        %v1077 = vadd.f32 0.0, %v1076
        %v1078 = vpop.f32.mrb[0].mxu0
        %v1079 = vadd.f32 0.0, %v1078
        %1080 = vmatprep.mubr.bf16.mxu0 0
        %1081 = vmatmul.mubr.bf16.gmra.mrb[0].mxu0 %v952
        %v1082 = vpop.f32.mrb[0].mxu0
        %v1083 = vadd.f32 0.0, %v1082
        %v1084 = vpop.f32.mrb[0].mxu0
        %v1085 = vadd.f32 0.0, %v1084
        %v1086 = vpop.f32.mrb[0].mxu0
        %v1087 = vadd.f32 0.0, %v1086
        %v1088 = vpop.f32.mrb[0].mxu0
        %v1089 = vadd.f32 0.0, %v1088
        %1090 = vmatprep.mubr.bf16.mxu0 0
        %1091 = vmatmul.mubr.bf16.gmra.mrb[0].mxu0 %v955
        %v1092 = vpop.f32.mrb[0].mxu0
        %v1093 = vadd.f32 0.0, %v1092
        %v1094 = vpop.f32.mrb[0].mxu0
        %v1095 = vadd.f32 0.0, %v1094
        %v1096 = vpop.f32.mrb[0].mxu0
        %v1097 = vadd.f32 0.0, %v1096
        %v1098 = vpop.f32.mrb[0].mxu0
        %v1099 = vadd.f32 0.0, %v1098
        %1100 = vmatprep.mubr.bf16.mxu0 0
        %1101 = vmatmul.mubr.bf16.gmra.mrb[0].mxu0 %v958
        %v1102 = vpop.f32.mrb[0].mxu0
        %v1103 = vadd.f32 0.0, %v1102
        %v1104 = vpop.f32.mrb[0].mxu0
        %v1105 = vadd.f32 0.0, %v1104
        %v1106 = vpop.f32.mrb[0].mxu0
        %v1107 = vadd.f32 0.0, %v1106
        %v1108 = vpop.f32.mrb[0].mxu0
        %v1109 = vadd.f32 0.0, %v1108
        %1110 = vmatprep.mubr.bf16.mxu0 0
        %1111 = vmatmul.mubr.bf16.gmra.mrb[0].mxu0 %v961
        %v1112 = vpop.f32.mrb[0].mxu0
        %v1113 = vadd.f32 0.0, %v1112
        %v1114 = vpop.f32.mrb[0].mxu0
        %v1115 = vadd.f32 0.0, %v1114
        %v1116 = vpop.f32.mrb[0].mxu0
        %v1117 = vadd.f32 0.0, %v1116
        %v1118 = vpop.f32.mrb[0].mxu0
        %v1119 = vadd.f32 0.0, %v1118
        %1120 = vmatprep.mubr.bf16.mxu0 0
        %1121 = vmatmul.mubr.bf16.gmra.mrb[0].mxu0 %v964
        %v1122 = vpop.f32.mrb[0].mxu0
        %v1123 = vadd.f32 0.0, %v1122
        %v1124 = vpop.f32.mrb[0].mxu0
        %v1125 = vadd.f32 0.0, %v1124
        %v1126 = vpop.f32.mrb[0].mxu0
        %v1127 = vadd.f32 0.0, %v1126
        %v1128 = vpop.f32.mrb[0].mxu0
        %v1129 = vadd.f32 0.0, %v1128
        %1130 = vmatprep.mubr.bf16.mxu0 0
        %1131 = vmatmul.mubr.bf16.gmra.mrb[0].mxu0 %v967
        %v1132 = vpop.f32.mrb[0].mxu0
        %v1133 = vadd.f32 0.0, %v1132
        %v1134 = vpop.f32.mrb[0].mxu0
        %v1135 = vadd.f32 0.0, %v1134
        %v1136 = vpop.f32.mrb[0].mxu0
        %v1137 = vadd.f32 0.0, %v1136
        %v1138 = vpop.f32.mrb[0].mxu0
        %v1139 = vadd.f32 0.0, %v1138
        %1140 = vmatprep.mubr.bf16.mxu0 0
        %1141 = vmatmul.mubr.bf16.gmra.mrb[0].mxu0 %v970
        %v1142 = vpop.f32.mrb[0].mxu0
        %v1143 = vadd.f32 0.0, %v1142
        %v1144 = vpop.f32.mrb[0].mxu0
        %v1145 = vadd.f32 0.0, %v1144
        %v1146 = vpop.f32.mrb[0].mxu0
        %v1147 = vadd.f32 0.0, %v1146
        %v1148 = vpop.f32.mrb[0].mxu0
        %v1149 = vadd.f32 0.0, %v1148
        %1150 = vmatprep.mubr.bf16.mxu0 0
        %1151 = vmatmul.mubr.bf16.gmra.mrb[0].mxu0 %v973
        %v1152 = vpop.f32.mrb[0].mxu0
        %v1153 = vadd.f32 0.0, %v1152
        %v1154 = vpop.f32.mrb[0].mxu0
        %v1155 = vadd.f32 0.0, %v1154
        %v1156 = vpop.f32.mrb[0].mxu0
        %v1157 = vadd.f32 0.0, %v1156
        %v1158 = vpop.f32.mrb[0].mxu0
        %v1159 = vadd.f32 0.0, %v1158
        %1160 = vmatprep.mubr.bf16.mxu0 0
        %1161 = vmatmul.mubr.bf16.gmra.mrb[0].mxu0 %v976
        %v1162 = vpop.f32.mrb[0].mxu0
        %v1163 = vadd.f32 0.0, %v1162
        %v1164 = vpop.f32.mrb[0].mxu0
        %v1165 = vadd.f32 0.0, %v1164
        %v1166 = vpop.f32.mrb[0].mxu0
        %v1167 = vadd.f32 0.0, %v1166
        %v1168 = vpop.f32.mrb[0].mxu0
        %v1169 = vadd.f32 0.0, %v1168
        %1170 = vmatprep.mubr.bf16.mxu0 0
        %1171 = vmatmul.mubr.bf16.gmra.mrb[0].mxu0 %v979
        %v1172 = vpop.f32.mrb[0].mxu0
        %v1173 = vadd.f32 0.0, %v1172
        %v1174 = vpop.f32.mrb[0].mxu0
        %v1175 = vadd.f32 0.0, %v1174
        %v1176 = vpop.f32.mrb[0].mxu0
        %v1177 = vadd.f32 0.0, %v1176
        %v1178 = vpop.f32.mrb[0].mxu0
        %v1179 = vadd.f32 0.0, %v1178
        %1180 = vdwg.mxu0
        %v1181 = vmax.f32 %v1023, %v1033
        %v1182 = vmax.f32 %v1027, %v1037
        %v1183 = vmax.f32 %v1181, %v1043
        %v1184 = vmax.f32 %v1182, %v1047
        %v1185 = vmax.f32 %v1183, %v1053
        %v1186 = vmax.f32 %v1184, %v1057
        %v1187 = vmax.f32 %v1185, %v1063
        %v1188 = vmax.f32 %v1186, %v1067
        %v1189 = vmax.f32 %v1187, %v1073
        %v1190 = vmax.f32 %v1188, %v1077
        %v1191 = vmax.f32 %v1189, %v1083
        %v1192 = vmax.f32 %v1190, %v1087
        %v1193 = vmax.f32 %v1191, %v1093
        %v1194 = vmax.f32 %v1192, %v1097
        %v1195 = vmax.f32 %v1193, %v1103
        %v1196 = vmax.f32 %v1194, %v1107
        %v1197 = vmax.f32 %v1195, %v1113
        %v1198 = vmax.f32 %v1196, %v1117
        %v1199 = vmax.f32 %v1197, %v1123
        %v1200 = vmax.f32 %v1198, %v1127
        %v1201 = vmax.f32 %v1199, %v1133
        %v1202 = vmax.f32 %v1200, %v1137
        %v1203 = vmax.f32 %v1201, %v1143
        %v1204 = vmax.f32 %v1202, %v1147
        %v1205 = vmax.f32 %v1203, %v1153
        %v1206 = vmax.f32 %v1204, %v1157
        %v1207 = vmax.f32 %v1205, %v1163
        %v1208 = vmax.f32 %v1206, %v1167
        %v1209 = vmax.f32 %v1207, %v1173
        %v1210 = vmax.f32 %v1208, %v1177
        %v1211 = vmax.f32 %v1209, %v1210
        %v1212 = vrot.slane %v1211, 4
        %v1213 = vmax.f32 %v1211, %v1212
        %v1214 = vrot.slane %v1213, 2
        %v1215 = vmax.f32 %v1213, %v1214
        %v1216 = vrot.slane %v1215, 1
        %v1217 = vmax.f32 %v1215, %v1216
        %v1218 = vmax.f32 %v1025, %v1035
        %v1219 = vmax.f32 %v1029, %v1039
        %v1220 = vmax.f32 %v1218, %v1045
        %v1221 = vmax.f32 %v1219, %v1049
        %v1222 = vmax.f32 %v1220, %v1055
        %v1223 = vmax.f32 %v1221, %v1059
        %v1224 = vmax.f32 %v1222, %v1065
        %v1225 = vmax.f32 %v1223, %v1069
        %v1226 = vmax.f32 %v1224, %v1075
        %v1227 = vmax.f32 %v1225, %v1079
        %v1228 = vmax.f32 %v1226, %v1085
        %v1229 = vmax.f32 %v1227, %v1089
        %v1230 = vmax.f32 %v1228, %v1095
        %v1231 = vmax.f32 %v1229, %v1099
        %v1232 = vmax.f32 %v1230, %v1105
        %v1233 = vmax.f32 %v1231, %v1109
        %v1234 = vmax.f32 %v1232, %v1115
        %v1235 = vmax.f32 %v1233, %v1119
        %v1236 = vmax.f32 %v1234, %v1125
        %v1237 = vmax.f32 %v1235, %v1129
        %v1238 = vmax.f32 %v1236, %v1135
        %v1239 = vmax.f32 %v1237, %v1139
        %v1240 = vmax.f32 %v1238, %v1145
        %v1241 = vmax.f32 %v1239, %v1149
        %v1242 = vmax.f32 %v1240, %v1155
        %v1243 = vmax.f32 %v1241, %v1159
        %v1244 = vmax.f32 %v1242, %v1165
        %v1245 = vmax.f32 %v1243, %v1169
        %v1246 = vmax.f32 %v1244, %v1175
        %v1247 = vmax.f32 %v1245, %v1179
        %v1248 = vmax.f32 %v1246, %v1247
        %v1249 = vrot.slane %v1248, 4
        %v1250 = vmax.f32 %v1248, %v1249
        %v1251 = vrot.slane %v1250, 2
        %v1252 = vmax.f32 %v1250, %v1251
        %v1253 = vrot.slane %v1252, 1
        %v1254 = vmax.f32 %v1252, %v1253
        %v1255 = vsub.f32 %v1023, %v1217
        %v1256 = vsub.f32 %v1025, %v1254
        %v1257 = vsub.f32 %v1027, %v1217
        %v1258 = vsub.f32 %v1029, %v1254
        %v1259 = vsub.f32 %v1033, %v1217
        %v1260 = vsub.f32 %v1035, %v1254
        %v1261 = vsub.f32 %v1037, %v1217
        %v1262 = vsub.f32 %v1039, %v1254
        %v1263 = vsub.f32 %v1043, %v1217
        %v1264 = vsub.f32 %v1045, %v1254
        %v1265 = vsub.f32 %v1047, %v1217
        %v1266 = vsub.f32 %v1049, %v1254
        %v1267 = vsub.f32 %v1053, %v1217
        %v1268 = vsub.f32 %v1055, %v1254
        %v1269 = vsub.f32 %v1057, %v1217
        %v1270 = vsub.f32 %v1059, %v1254
        %v1271 = vsub.f32 %v1063, %v1217
        %v1272 = vsub.f32 %v1065, %v1254
        %v1273 = vsub.f32 %v1067, %v1217
        %v1274 = vsub.f32 %v1069, %v1254
        %v1275 = vsub.f32 %v1073, %v1217
        %v1276 = vsub.f32 %v1075, %v1254
        %v1277 = vsub.f32 %v1077, %v1217
        %v1278 = vsub.f32 %v1079, %v1254
        %v1279 = vsub.f32 %v1083, %v1217
        %v1280 = vsub.f32 %v1085, %v1254
        %v1281 = vsub.f32 %v1087, %v1217
        %v1282 = vsub.f32 %v1089, %v1254
        %v1283 = vsub.f32 %v1093, %v1217
        %v1284 = vsub.f32 %v1095, %v1254
        %v1285 = vsub.f32 %v1097, %v1217
        %v1286 = vsub.f32 %v1099, %v1254
        %v1287 = vsub.f32 %v1103, %v1217
        %v1288 = vsub.f32 %v1105, %v1254
        %v1289 = vsub.f32 %v1107, %v1217
        %v1290 = vsub.f32 %v1109, %v1254
        %v1291 = vsub.f32 %v1113, %v1217
        %v1292 = vsub.f32 %v1115, %v1254
        %v1293 = vsub.f32 %v1117, %v1217
        %v1294 = vsub.f32 %v1119, %v1254
        %v1295 = vsub.f32 %v1123, %v1217
        %v1296 = vsub.f32 %v1125, %v1254
        %v1297 = vsub.f32 %v1127, %v1217
        %v1298 = vsub.f32 %v1129, %v1254
        %v1299 = vsub.f32 %v1133, %v1217
        %v1300 = vsub.f32 %v1135, %v1254
        %v1301 = vsub.f32 %v1137, %v1217
        %v1302 = vsub.f32 %v1139, %v1254
        %v1303 = vsub.f32 %v1143, %v1217
        %v1304 = vsub.f32 %v1145, %v1254
        %v1305 = vsub.f32 %v1147, %v1217
        %v1306 = vsub.f32 %v1149, %v1254
        %v1307 = vsub.f32 %v1153, %v1217
        %v1308 = vsub.f32 %v1155, %v1254
        %v1309 = vsub.f32 %v1157, %v1217
        %v1310 = vsub.f32 %v1159, %v1254
        %v1311 = vsub.f32 %v1163, %v1217
        %v1312 = vsub.f32 %v1165, %v1254
        %v1313 = vsub.f32 %v1167, %v1217
        %v1314 = vsub.f32 %v1169, %v1254
        %v1315 = vsub.f32 %v1173, %v1217
        %v1316 = vsub.f32 %v1175, %v1254
        %v1317 = vsub.f32 %v1177, %v1217
        %v1318 = vsub.f32 %v1179, %v1254
        %v1319 = vmul.f32 %v1255, 1.442695
        %v1320 = vpow.pop %v1319
        %v1321 = vmul.f32 %v1256, 1.442695
        %v1322 = vpow.pop %v1321
        %v1323 = vmul.f32 %v1257, 1.442695
        %v1324 = vpow.pop %v1323
        %v1325 = vmul.f32 %v1258, 1.442695
        %v1326 = vpow.pop %v1325
        %v1327 = vmul.f32 %v1259, 1.442695
        %v1328 = vpow.pop %v1327
        %v1329 = vmul.f32 %v1260, 1.442695
        %v1330 = vpow.pop %v1329
        %v1331 = vmul.f32 %v1261, 1.442695
        %v1332 = vpow.pop %v1331
        %v1333 = vmul.f32 %v1262, 1.442695
        %v1334 = vpow.pop %v1333
        %v1335 = vmul.f32 %v1263, 1.442695
        %v1336 = vpow.pop %v1335
        %v1337 = vmul.f32 %v1264, 1.442695
        %v1338 = vpow.pop %v1337
        %v1339 = vmul.f32 %v1265, 1.442695
        %v1340 = vpow.pop %v1339
        %v1341 = vmul.f32 %v1266, 1.442695
        %v1342 = vpow.pop %v1341
        %v1343 = vmul.f32 %v1267, 1.442695
        %v1344 = vpow.pop %v1343
        %v1345 = vmul.f32 %v1268, 1.442695
        %v1346 = vpow.pop %v1345
        %v1347 = vmul.f32 %v1269, 1.442695
        %v1348 = vpow.pop %v1347
        %v1349 = vmul.f32 %v1270, 1.442695
        %v1350 = vpow.pop %v1349
        %v1351 = vmul.f32 %v1271, 1.442695
        %v1352 = vpow.pop %v1351
        %v1353 = vmul.f32 %v1272, 1.442695
        %v1354 = vpow.pop %v1353
        %v1355 = vmul.f32 %v1273, 1.442695
        %v1356 = vpow.pop %v1355
        %v1357 = vmul.f32 %v1274, 1.442695
        %v1358 = vpow.pop %v1357
        %v1359 = vmul.f32 %v1275, 1.442695
        %v1360 = vpow.pop %v1359
        %v1361 = vmul.f32 %v1276, 1.442695
        %v1362 = vpow.pop %v1361
        %v1363 = vmul.f32 %v1277, 1.442695
        %v1364 = vpow.pop %v1363
        %v1365 = vmul.f32 %v1278, 1.442695
        %v1366 = vpow.pop %v1365
        %v1367 = vmul.f32 %v1279, 1.442695
        %v1368 = vpow.pop %v1367
        %v1369 = vmul.f32 %v1280, 1.442695
        %v1370 = vpow.pop %v1369
        %v1371 = vmul.f32 %v1281, 1.442695
        %v1372 = vpow.pop %v1371
        %v1373 = vmul.f32 %v1282, 1.442695
        %v1374 = vpow.pop %v1373
        %v1375 = vmul.f32 %v1283, 1.442695
        %v1376 = vpow.pop %v1375
        %v1377 = vmul.f32 %v1284, 1.442695
        %v1378 = vpow.pop %v1377
        %v1379 = vmul.f32 %v1285, 1.442695
        %v1380 = vpow.pop %v1379
        %v1381 = vmul.f32 %v1286, 1.442695
        %v1382 = vpow.pop %v1381
        %v1383 = vmul.f32 %v1287, 1.442695
        %v1384 = vpow.pop %v1383
        %v1385 = vmul.f32 %v1288, 1.442695
        %v1386 = vpow.pop %v1385
        %v1387 = vmul.f32 %v1289, 1.442695
        %v1388 = vpow.pop %v1387
        %v1389 = vmul.f32 %v1290, 1.442695
        %v1390 = vpow.pop %v1389
        %v1391 = vmul.f32 %v1291, 1.442695
        %v1392 = vpow.pop %v1391
        %v1393 = vmul.f32 %v1292, 1.442695
        %v1394 = vpow.pop %v1393
        %v1395 = vmul.f32 %v1293, 1.442695
        %v1396 = vpow.pop %v1395
        %v1397 = vmul.f32 %v1294, 1.442695
        %v1398 = vpow.pop %v1397
        %v1399 = vmul.f32 %v1295, 1.442695
        %v1400 = vpow.pop %v1399
        %v1401 = vmul.f32 %v1296, 1.442695
        %v1402 = vpow.pop %v1401
        %v1403 = vmul.f32 %v1297, 1.442695
        %v1404 = vpow.pop %v1403
        %v1405 = vmul.f32 %v1298, 1.442695
        %v1406 = vpow.pop %v1405
        %v1407 = vmul.f32 %v1299, 1.442695
        %v1408 = vpow.pop %v1407
        %v1409 = vmul.f32 %v1300, 1.442695
        %v1410 = vpow.pop %v1409
        %v1411 = vmul.f32 %v1301, 1.442695
        %v1412 = vpow.pop %v1411
        %v1413 = vmul.f32 %v1302, 1.442695
        %v1414 = vpow.pop %v1413
        %v1415 = vmul.f32 %v1303, 1.442695
        %v1416 = vpow.pop %v1415
        %v1417 = vmul.f32 %v1304, 1.442695
        %v1418 = vpow.pop %v1417
        %v1419 = vmul.f32 %v1305, 1.442695
        %v1420 = vpow.pop %v1419
        %v1421 = vmul.f32 %v1306, 1.442695
        %v1422 = vpow.pop %v1421
        %v1423 = vmul.f32 %v1307, 1.442695
        %v1424 = vpow.pop %v1423
        %v1425 = vmul.f32 %v1308, 1.442695
        %v1426 = vpow.pop %v1425
        %v1427 = vmul.f32 %v1309, 1.442695
        %v1428 = vpow.pop %v1427
        %v1429 = vmul.f32 %v1310, 1.442695
        %v1430 = vpow.pop %v1429
        %v1431 = vmul.f32 %v1311, 1.442695
        %v1432 = vpow.pop %v1431
        %v1433 = vmul.f32 %v1312, 1.442695
        %v1434 = vpow.pop %v1433
        %v1435 = vmul.f32 %v1313, 1.442695
        %v1436 = vpow.pop %v1435
        %v1437 = vmul.f32 %v1314, 1.442695
        %v1438 = vpow.pop %v1437
        %v1439 = vmul.f32 %v1315, 1.442695
        %v1440 = vpow.pop %v1439
        %v1441 = vmul.f32 %v1316, 1.442695
        %v1442 = vpow.pop %v1441
        %v1443 = vmul.f32 %v1317, 1.442695
        %v1444 = vpow.pop %v1443
        %v1445 = vmul.f32 %v1318, 1.442695
        %v1446 = vpow.pop %v1445
        %v1447 = vadd.f32 %v1320, %v1324
        %v1448 = vadd.f32 %v1447, %v1328
        %v1449 = vadd.f32 %v1448, %v1332
        %v1450 = vadd.f32 %v1449, %v1336
        %v1451 = vadd.f32 %v1450, %v1340
        %v1452 = vadd.f32 %v1451, %v1344
        %v1453 = vadd.f32 %v1452, %v1348
        %v1454 = vadd.f32 %v1453, %v1352
        %v1455 = vadd.f32 %v1454, %v1356
        %v1456 = vadd.f32 %v1455, %v1360
        %v1457 = vadd.f32 %v1456, %v1364
        %v1458 = vadd.f32 %v1457, %v1368
        %v1459 = vadd.f32 %v1458, %v1372
        %v1460 = vadd.f32 %v1459, %v1376
        %v1461 = vadd.f32 %v1460, %v1380
        %v1462 = vadd.f32 %v1461, %v1384
        %v1463 = vadd.f32 %v1462, %v1388
        %v1464 = vadd.f32 %v1463, %v1392
        %v1465 = vadd.f32 %v1464, %v1396
        %v1466 = vadd.f32 %v1465, %v1400
        %v1467 = vadd.f32 %v1466, %v1404
        %v1468 = vadd.f32 %v1467, %v1408
        %v1469 = vadd.f32 %v1468, %v1412
        %v1470 = vadd.f32 %v1469, %v1416
        %v1471 = vadd.f32 %v1470, %v1420
        %v1472 = vadd.f32 %v1471, %v1424
        %v1473 = vadd.f32 %v1472, %v1428
        %v1474 = vadd.f32 %v1473, %v1432
        %v1475 = vadd.f32 %v1474, %v1436
        %v1476 = vadd.f32 %v1475, %v1440
        %v1477 = vadd.f32 %v1476, %v1444
        %v1478 = vrot.slane %v1477, 4
        %v1479 = vadd.f32 %v1477, %v1478
        %v1480 = vrot.slane %v1479, 2
        %v1481 = vadd.f32 %v1479, %v1480
        %v1482 = vrot.slane %v1481, 1
        %v1483 = vadd.f32 %v1481, %v1482
        %v1484 = vadd.f32 %v1322, %v1326
        %v1485 = vadd.f32 %v1484, %v1330
        %v1486 = vadd.f32 %v1485, %v1334
        %v1487 = vadd.f32 %v1486, %v1338
        %v1488 = vadd.f32 %v1487, %v1342
        %v1489 = vadd.f32 %v1488, %v1346
        %v1490 = vadd.f32 %v1489, %v1350
        %v1491 = vadd.f32 %v1490, %v1354
        %v1492 = vadd.f32 %v1491, %v1358
        %v1493 = vadd.f32 %v1492, %v1362
        %v1494 = vadd.f32 %v1493, %v1366
        %v1495 = vadd.f32 %v1494, %v1370
        %v1496 = vadd.f32 %v1495, %v1374
        %v1497 = vadd.f32 %v1496, %v1378
        %v1498 = vadd.f32 %v1497, %v1382
        %v1499 = vadd.f32 %v1498, %v1386
        %v1500 = vadd.f32 %v1499, %v1390
        %v1501 = vadd.f32 %v1500, %v1394
        %v1502 = vadd.f32 %v1501, %v1398
        %v1503 = vadd.f32 %v1502, %v1402
        %v1504 = vadd.f32 %v1503, %v1406
        %v1505 = vadd.f32 %v1504, %v1410
        %v1506 = vadd.f32 %v1505, %v1414
        %v1507 = vadd.f32 %v1506, %v1418
        %v1508 = vadd.f32 %v1507, %v1422
        %v1509 = vadd.f32 %v1508, %v1426
        %v1510 = vadd.f32 %v1509, %v1430
        %v1511 = vadd.f32 %v1510, %v1434
        %v1512 = vadd.f32 %v1511, %v1438
        %v1513 = vadd.f32 %v1512, %v1442
        %v1514 = vadd.f32 %v1513, %v1446
        %v1515 = vrot.slane %v1514, 4
        %v1516 = vadd.f32 %v1514, %v1515
        %v1517 = vrot.slane %v1516, 2
        %v1518 = vadd.f32 %v1516, %v1517
        %v1519 = vrot.slane %v1518, 1
        %v1520 = vadd.f32 %v1518, %v1519
        %v1521 = vrcp.pop %v1483
        %v1522 = vrcp.pop %v1520
        %v1523 = vmul.f32 %v1320, %v1521
        %v1524 = vmul.f32 %v1322, %v1522
        %v1525 = vmul.f32 %v1324, %v1521
        %v1526 = vmul.f32 %v1326, %v1522
        %v1527 = vmul.f32 %v1328, %v1521
        %v1528 = vmul.f32 %v1330, %v1522
        %v1529 = vmul.f32 %v1332, %v1521
        %v1530 = vmul.f32 %v1334, %v1522
        %v1531 = vmul.f32 %v1336, %v1521
        %v1532 = vmul.f32 %v1338, %v1522
        %v1533 = vmul.f32 %v1340, %v1521
        %v1534 = vmul.f32 %v1342, %v1522
        %v1535 = vmul.f32 %v1344, %v1521
        %v1536 = vmul.f32 %v1346, %v1522
        %v1537 = vmul.f32 %v1348, %v1521
        %v1538 = vmul.f32 %v1350, %v1522
        %v1539 = vmul.f32 %v1352, %v1521
        %v1540 = vmul.f32 %v1354, %v1522
        %v1541 = vmul.f32 %v1356, %v1521
        %v1542 = vmul.f32 %v1358, %v1522
        %v1543 = vmul.f32 %v1360, %v1521
        %v1544 = vmul.f32 %v1362, %v1522
        %v1545 = vmul.f32 %v1364, %v1521
        %v1546 = vmul.f32 %v1366, %v1522
        %v1547 = vmul.f32 %v1368, %v1521
        %v1548 = vmul.f32 %v1370, %v1522
        %v1549 = vmul.f32 %v1372, %v1521
        %v1550 = vmul.f32 %v1374, %v1522
        %v1551 = vmul.f32 %v1376, %v1521
        %v1552 = vmul.f32 %v1378, %v1522
        %v1553 = vmul.f32 %v1380, %v1521
        %v1554 = vmul.f32 %v1382, %v1522
        %v1555 = vmul.f32 %v1384, %v1521
        %v1556 = vmul.f32 %v1386, %v1522
        %v1557 = vmul.f32 %v1388, %v1521
        %v1558 = vmul.f32 %v1390, %v1522
        %v1559 = vmul.f32 %v1392, %v1521
        %v1560 = vmul.f32 %v1394, %v1522
        %v1561 = vmul.f32 %v1396, %v1521
        %v1562 = vmul.f32 %v1398, %v1522
        %v1563 = vmul.f32 %v1400, %v1521
        %v1564 = vmul.f32 %v1402, %v1522
        %v1565 = vmul.f32 %v1404, %v1521
        %v1566 = vmul.f32 %v1406, %v1522
        %v1567 = vmul.f32 %v1408, %v1521
        %v1568 = vmul.f32 %v1410, %v1522
        %v1569 = vmul.f32 %v1412, %v1521
        %v1570 = vmul.f32 %v1414, %v1522
        %v1571 = vmul.f32 %v1416, %v1521
        %v1572 = vmul.f32 %v1418, %v1522
        %v1573 = vmul.f32 %v1420, %v1521
        %v1574 = vmul.f32 %v1422, %v1522
        %v1575 = vmul.f32 %v1424, %v1521
        %v1576 = vmul.f32 %v1426, %v1522
        %v1577 = vmul.f32 %v1428, %v1521
        %v1578 = vmul.f32 %v1430, %v1522
        %v1579 = vmul.f32 %v1432, %v1521
        %v1580 = vmul.f32 %v1434, %v1522
        %v1581 = vmul.f32 %v1436, %v1521
        %v1582 = vmul.f32 %v1438, %v1522
        %v1583 = vmul.f32 %v1440, %v1521
        %v1584 = vmul.f32 %v1442, %v1522
        %v1585 = vmul.f32 %v1444, %v1521
        %v1586 = vmul.f32 %v1446, %v1522
        %v1587 = vpack.c.bf16 %v1525, %v1523
        %v1588 = vpack.c.bf16 %v1526, %v1524
        %v1589 = vpack.c.bf16 %v1529, %v1527
        %v1590 = vpack.c.bf16 %v1530, %v1528
        %v1591 = vpack.c.bf16 %v1533, %v1531
        %v1592 = vpack.c.bf16 %v1534, %v1532
        %v1593 = vpack.c.bf16 %v1537, %v1535
        %v1594 = vpack.c.bf16 %v1538, %v1536
        %v1595 = vpack.c.bf16 %v1541, %v1539
        %v1596 = vpack.c.bf16 %v1542, %v1540
        %v1597 = vpack.c.bf16 %v1545, %v1543
        %v1598 = vpack.c.bf16 %v1546, %v1544
        %v1599 = vpack.c.bf16 %v1549, %v1547
        %v1600 = vpack.c.bf16 %v1550, %v1548
        %v1601 = vpack.c.bf16 %v1553, %v1551
        %v1602 = vpack.c.bf16 %v1554, %v1552
        %v1603 = vpack.c.bf16 %v1557, %v1555
        %v1604 = vpack.c.bf16 %v1558, %v1556
        %v1605 = vpack.c.bf16 %v1561, %v1559
        %v1606 = vpack.c.bf16 %v1562, %v1560
        %v1607 = vpack.c.bf16 %v1565, %v1563
        %v1608 = vpack.c.bf16 %v1566, %v1564
        %v1609 = vpack.c.bf16 %v1569, %v1567
        %v1610 = vpack.c.bf16 %v1570, %v1568
        %v1611 = vpack.c.bf16 %v1573, %v1571
        %v1612 = vpack.c.bf16 %v1574, %v1572
        %v1613 = vpack.c.bf16 %v1577, %v1575
        %v1614 = vpack.c.bf16 %v1578, %v1576
        %v1615 = vpack.c.bf16 %v1581, %v1579
        %v1616 = vpack.c.bf16 %v1582, %v1580
        %v1617 = vpack.c.bf16 %v1585, %v1583
        %v1618 = vpack.c.bf16 %v1586, %v1584
        %1619 = vmatprep.subr.bf16.mxu0 %v1588
        %1620 = vmatpush1.bf16.msra.mxu0 %v1587
        %1621 = vmatprep.subr.bf16.mxu0 %v1590
        %1622 = vmatpush1.bf16.msra.mxu0 %v1589
        %1623 = vmatprep.subr.bf16.mxu0 %v1592
        %1624 = vmatpush1.bf16.msra.mxu0 %v1591
        %1625 = vmatprep.subr.bf16.mxu0 %v1594
        %1626 = vmatpush1.bf16.msra.mxu0 %v1593
        %1627 = vmatprep.subr.bf16.mxu0 %v1596
        %1628 = vmatpush1.bf16.msra.mxu0 %v1595
        %1629 = vmatprep.subr.bf16.mxu0 %v1598
        %1630 = vmatpush1.bf16.msra.mxu0 %v1597
        %1631 = vmatprep.subr.bf16.mxu0 %v1600
        %1632 = vmatpush1.bf16.msra.mxu0 %v1599
        %1633 = vmatprep.subr.bf16.mxu0 %v1602
        %1634 = vmatpush1.bf16.msra.mxu0 %v1601
        %1635 = vmatprep.subr.bf16.mxu0 %v1604
        %1636 = vmatpush1.bf16.msra.mxu0 %v1603
        %1637 = vmatprep.subr.bf16.mxu0 %v1606
        %1638 = vmatpush1.bf16.msra.mxu0 %v1605
        %1639 = vmatprep.subr.bf16.mxu0 %v1608
        %1640 = vmatpush1.bf16.msra.mxu0 %v1607
        %1641 = vmatprep.subr.bf16.mxu0 %v1610
        %1642 = vmatpush1.bf16.msra.mxu0 %v1609
        %1643 = vmatprep.subr.bf16.mxu0 %v1612
        %1644 = vmatpush1.bf16.msra.mxu0 %v1611
        %1645 = vmatprep.subr.bf16.mxu0 %v1614
        %1646 = vmatpush1.bf16.msra.mxu0 %v1613
        %1647 = vmatprep.subr.bf16.mxu0 %v1616
        %1648 = vmatpush1.bf16.msra.mxu0 %v1615
        %1649 = vmatprep.subr.bf16.mxu0 %v1618
        %1650 = vmatpush1.bf16.msra.mxu0 %v1617
        %1651 = vmatprep.mubr.bf16.mxu0 %v899
        %1652 = vmatmul.mubr.bf16.gmra.mrb[0].mxu0 %v898
        %v1653 = vpop.f32.mrb[0].mxu0
        %v1654 = vadd.f32 0.0, %v1653
        %v1655 = vpop.f32.mrb[0].mxu0
        %v1656 = vadd.f32 0.0, %v1655
        %v1657 = vpop.f32.mrb[0].mxu0
        %v1658 = vpop.f32.mrb[0].mxu0
        %1659 = vdwg.mxu0
        %v1660 = vstv %s188
        %v1661 = vmul.f32 %v1660, %v1654
        %v1662 = vmul.f32 %v1660, %v1656
        %v1663 = vadd.f32 %v1661, %v189
        %v1664 = vadd.f32 %v1662, %v191
        %v1667 = vcombine.low %v1663, %v1664
        %1669 = vst [vmem:[%s186] sm:$0xff] %v1667
        %p1670 = scmp.lt.s32.totalorder %s16, 1
        %s1671 = scalar_select %p1670, %s16, 1
        %s1672 = smul.addr %s1671, 2
        %s1673 = smul.addr %s1672, 4
        %s1674 = scalar_lea.vmem %s3, %s1673
        // Predicated region
        $region37: #{channel_attention.1} parent=31 // pred_check
          %p1675 = pneg %p102
        $region38: #{channel_attention.1} parent=31 // pred_check_branch
          %1677 = sbr.rel (%p1675) target = $region40
        $region39: #{channel_attention.1} parent=31 // pred_region
          _
        $region40: #{channel_attention.1} parent=31 // pred_fallthru
          _
      $region32: #{channel_attention.1} parent=5 // pred_fallthru
        _
      %p1678 = scmp.le.s32.totalorder 2, %s11
      // Predicated region
      $region41: #{channel_attention.1} parent=5 // pred_check
        %p1679 = pneg %p1678
      $region42: #{channel_attention.1} parent=5 // pred_check_branch
        %1681 = sbr.rel (%p1679) target = $region44
      $region43: #{channel_attention.1} parent=5 // pred_region
        %s1682 = ssub.s32 %s11, 2
        // Predicated region
        $region45: #{channel_attention.1} parent=43 // pred_check
          %p1683 = pneg %p108
        $region46: #{channel_attention.1} parent=43 // pred_check_branch
          %1685 = sbr.rel (%p1683) target = $region48
        $region47: #{channel_attention.1} parent=43 // pred_region
          %p1686 = scmp.lt.s32.totalorder %s17, 1
          %s1687 = scalar_select %p1686, %s17, 1
          %s1688 = smul.addr %s1687, 2
          %s1689 = smul.addr %s1688, 4
          %s1690 = scalar_lea.vmem %s3, %s1689
        $region48: #{channel_attention.1} parent=43 // pred_fallthru
          _
      $region44: #{channel_attention.1} parent=5 // pred_fallthru
        _
    $region6: #{channel_attention.1} parent=1 // loop_footer
      %s15 = sadd.s32 1, %s11
    $region7: #{channel_attention.1} parent=1 // loop_footer_branch
      %10 = sbr.rel target = $region3
    $region8: #{channel_attention.1} parent=1 // loop_exit
      _
    %1691 = vsyncpa [#allocation4], 1
    %s1692 = scalar_lea.sflag [#allocation4], 1
    %1693 = vsyncpa %s1692, 1

</llo_original>
